<compile_context>
chip_gen: v7x
topology: tpu7x:2x2x1
jax: 0.10.0
libtpu: 0.0.40
codegen_flags: <defaults>
</compile_context>

<pallas_src>
import functools

import jax
import jax.numpy as jnp
from jax import lax
from jax.experimental import pallas as pl
from jax.experimental.pallas import tpu as pltpu


def edge_filter_gather_kernel(coeff, nc, n_chunks,
                              dist_ref, cut_ref, src_ref, h_ref,
                              off_ref, w1e_ref, b1e_ref, w2e_ref, b2e_ref,
                              msg_ref):
    """Pass 1 (edge-parallel): msg[e] = h[src[e]] * (edge_nn(smear(d[e])) * C[e])."""
    te = dist_ref.shape[0]
    F = h_ref.shape[1]

    # ---- edge filter: GaussianSmearing -> Linear -> ReLU -> Linear -> cosine cutoff ----
    d = dist_ref[...]                                            # [te, 1]
    smear = jnp.exp(coeff * (d - off_ref[...]) ** 2)             # [te, g_pad] (pad cols hit zero weights)
    hidden = jnp.maximum(
        jnp.dot(smear, w1e_ref[...], preferred_element_type=jnp.float32) + b1e_ref[...], 0.0)
    wfilt = jnp.dot(hidden, w2e_ref[...], preferred_element_type=jnp.float32) + b2e_ref[...]
    wfilt = wfilt * cut_ref[...]                                 # [te, F]; 0 for padded edges

    # ---- gather h[src] via bf16 one-hot matmul in native [M,K]x[K,N] MXU layout ----
    src = src_ref[...]                                           # [te, 1] int32 (sublane column)
    if n_chunks == 1:
        liota = lax.broadcasted_iota(jnp.int32, (te, nc), 1)
        onehot = (liota == src).astype(jnp.bfloat16)             # [te, N_pad]
        h_src = jnp.dot(onehot, h_ref[...], preferred_element_type=jnp.float32)
    else:
        def gather_chunk(c, acc):
            start = pl.multiple_of(c * nc, nc)
            liota = lax.broadcasted_iota(jnp.int32, (te, nc), 1) + start
            onehot = (liota == src).astype(jnp.bfloat16)         # [te, nc]
            h_chunk = h_ref[pl.ds(start, nc), :]                 # [nc, F] bf16
            return acc + jnp.dot(onehot, h_chunk, preferred_element_type=jnp.float32)
        h_src = lax.fori_loop(0, n_chunks, gather_chunk, jnp.zeros((te, F), jnp.float32))

    # bf16 messages: halves HBM traffic & doubles MXU rate in pass 2 (~1e-2 rel error,
    # covered by the test tolerance).
    msg_ref[...] = (h_src * wfilt).astype(jnp.bfloat16)


def scatter_lin2_kernel(dst_ref, msg_ref, xres_ref, wl2_ref, bl2_ref, out_ref, agg_scr):
    """Pass 2: scatter-add messages to dst nodes, then lin2 + ReLU + residual."""
    i = pl.program_id(0)                       # node-tile index   ("parallel")
    k = pl.program_id(1)                       # edge-tile index   ("arbitrary", reduction)
    tn = agg_scr.shape[0]
    te = msg_ref.shape[0]

    @pl.when(k == 0)
    def _init():
        agg_scr[...] = jnp.zeros_like(agg_scr)

    # scatter-add via bf16 one-hot matmul in native [M,K]x[K,N] MXU layout (f32 accumulate)
    dst = dst_ref[...]                                           # [1, te] int32 (lane-dense)
    tiota = lax.broadcasted_iota(jnp.int32, (tn, te), 0) + i * tn
    onehot = (tiota == dst).astype(jnp.bfloat16)                 # [tn, te]
    agg_scr[...] += jnp.dot(onehot, msg_ref[...], preferred_element_type=jnp.float32)

    @pl.when(k == pl.num_programs(1) - 1)
    def _finalize():
        y = jnp.dot(agg_scr[...], wl2_ref[...], preferred_element_type=jnp.float32) + bl2_ref[...]
        y = jnp.maximum(y, 0.0)                # activation (ReLU); dropout = identity (eval)
        out_ref[...] = xres_ref[...] + y       # node residual


def _round_up(a, b):
    return (a + b - 1) // b * b


def gcn_conv_gnn_layer(x, edge_attr, edge_weight, src, dst, params,
                       *, tn=256, te=512, vmem_limit_bytes=48 * 1024 * 1024):
    """Fused Pallas forward of GCNConvGNNLayer (use_edge_attr=True, eval mode)."""
    N, D = x.shape
    E = int(edge_attr.shape[0])
    G = int(params["offset"].shape[0])
    F = int(params["w1e"].shape[1])

    # ---- tile sizes clamped to the (padded) problem size, (8,128)-aligned ----
    tn = min(tn, _round_up(N, 8))
    te = min(te, _round_up(E, 128))
    N_pad = _round_up(N, tn)
    E_pad = _round_up(E, te)
    g_pad = _round_up(G, 128)

    # node-chunk size for the in-kernel one-hot gather (bounds vreg/VMEM footprint)
    nc = tn
    for cand in (256, 512):
        if cand <= N_pad and N_pad % cand == 0:
            nc = max(nc, cand)
    n_chunks = N_pad // nc

    offset = params["offset"].astype(jnp.float32)
    cutoff = float(params["cutoff"])
    coeff = float(-0.5 / float(offset[1] - offset[0]) ** 2)      # GaussianSmearing coefficient

    # ---- wrapper-side precompute (each is one cheap XLA op) ----
    x_pad = jnp.zeros((N_pad, D), jnp.float32).at[:N].set(x.astype(jnp.float32))
    # CFConv.lin1 once for all nodes (was recomputed per node tile in the old kernel)
    h = jnp.dot(x_pad, params["wl1"].astype(jnp.float32)).astype(jnp.bfloat16)   # [N_pad, F]

    # cosine cutoff factor; 0 on padded edges => their messages are exactly 0
    cut = 0.5 * (jnp.cos(edge_weight.astype(jnp.float32) * jnp.pi / cutoff) + 1.0)
    cut_pad = jnp.zeros((E_pad, 1), jnp.float32).at[:E, 0].set(cut)
    dist_pad = jnp.zeros((E_pad, 1), jnp.float32).at[:E, 0].set(edge_attr.astype(jnp.float32))
    src_col = jnp.zeros((E_pad, 1), jnp.int32).at[:E, 0].set(src.astype(jnp.int32))
    dst_row = jnp.zeros((1, E_pad), jnp.int32).at[0, :E].set(dst.astype(jnp.int32))

    # pad gaussian dim to a full 128-lane slab; extra weight rows are zero (exact)
    off_pad = jnp.zeros((1, g_pad), jnp.float32).at[0, :G].set(offset)
    w1e_pad = jnp.zeros((g_pad, F), jnp.float32).at[:G].set(params["w1e"].astype(jnp.float32))

    # ---------------- pass 1: per-edge filter + gather (fully parallel over edges) -------
    msg = pl.pallas_call(
        functools.partial(edge_filter_gather_kernel, coeff, nc, n_chunks),
        grid=(E_pad // te,),
        in_specs=[
            pl.BlockSpec((te, 1), lambda e: (e, 0)),      # edge distances
            pl.BlockSpec((te, 1), lambda e: (e, 0)),      # cosine-cutoff factor
            pl.BlockSpec((te, 1), lambda e: (e, 0)),      # src indices (sublane column)
            pl.BlockSpec((N_pad, F), lambda e: (0, 0)),   # h = lin1(x), resident bf16
            pl.BlockSpec((1, g_pad), lambda e: (0, 0)),   # gaussian offsets (padded)
            pl.BlockSpec((g_pad, F), lambda e: (0, 0)),   # edge_nn linear 1
            pl.BlockSpec((1, F), lambda e: (0, 0)),
            pl.BlockSpec((F, F), lambda e: (0, 0)),       # edge_nn linear 2
            pl.BlockSpec((1, F), lambda e: (0, 0)),
        ],
        out_specs=pl.BlockSpec((te, F), lambda e: (e, 0)),
        out_shape=jax.ShapeDtypeStruct((E_pad, F), jnp.bfloat16),
        compiler_params=pltpu.CompilerParams(
            dimension_semantics=("parallel",),
            vmem_limit_bytes=vmem_limit_bytes),
    )(dist_pad, cut_pad, src_col, h, off_pad, w1e_pad,
      params["b1e"].astype(jnp.float32), params["w2e"].astype(jnp.float32),
      params["b2e"].astype(jnp.float32))

    # ---------------- pass 2: scatter-add + lin2 + ReLU + residual -----------------------
    out = pl.pallas_call(
        scatter_lin2_kernel,
        grid=(N_pad // tn, E_pad // te),
        in_specs=[
            pl.BlockSpec((1, te), lambda i, k: (0, k)),   # dst indices (lane-dense row)
            pl.BlockSpec((te, F), lambda i, k: (k, 0)),   # messages from pass 1 (bf16)
            pl.BlockSpec((tn, D), lambda i, k: (i, 0)),   # x tile (residual), resident over k
            pl.BlockSpec((F, D), lambda i, k: (0, 0)),    # CFConv.lin2 weight
            pl.BlockSpec((1, D), lambda i, k: (0, 0)),    # CFConv.lin2 bias
        ],
        out_specs=pl.BlockSpec((tn, D), lambda i, k: (i, 0)),
        out_shape=jax.ShapeDtypeStruct((N_pad, D), jnp.float32),
        scratch_shapes=[pltpu.VMEM((tn, F), jnp.float32)],        # per-node-tile accumulator
        compiler_params=pltpu.CompilerParams(
            dimension_semantics=("parallel", "arbitrary"),
            vmem_limit_bytes=vmem_limit_bytes),
    )(dst_row, msg, x_pad, params["wl2"].astype(jnp.float32),
      params["bl2"].astype(jnp.float32))

    return out[:N]


def reference_forward(x, edge_attr, edge_weight, src, dst, params):
    """Pure-JAX reference of GCNConvGNNLayer.forward (use_edge_attr=True, eval mode)."""
    offset = params["offset"]
    cutoff = params["cutoff"]
    coeff = -0.5 / (offset[1] - offset[0]) ** 2
    smear = jnp.exp(coeff * (edge_attr[:, None] - offset[None, :]) ** 2)   # GaussianSmearing
    C = 0.5 * (jnp.cos(edge_weight * jnp.pi / cutoff) + 1.0)               # CFConv cutoff
    wfilt = jnp.maximum(smear @ params["w1e"] + params["b1e"], 0.0) @ params["w2e"] + params["b2e"]
    wfilt = wfilt * C[:, None]
    h = x @ params["wl1"]                          # lin1 (no bias)
    msg = h[src] * wfilt                           # message = x_j * W
    agg = jnp.zeros_like(h).at[dst].add(msg)       # aggr='add' at target nodes
    y = agg @ params["wl2"] + params["bl2"]        # lin2
    y = jnp.maximum(y, 0.0)                        # ReLU; dropout identity in eval
    return x + y                                   # node residual (batch.x = y)


if __name__ == "__main__":
    N, E = 60, 250                 # nodes, edges (intentionally not tile multiples -> padding path)
    D = 64                         # dim_in == dim_out (residual)
    F = 64                         # n_filters
    G = 50                         # n_gaussians
    cutoff = 5.0

    key = jax.random.PRNGKey(0)
    ks = jax.random.split(key, 12)

    x = jax.random.normal(ks[0], (N, D), dtype=jnp.float32)
    dist = jax.random.uniform(ks[1], (E,), jnp.float32, 0.1, cutoff)   # batch.edge_attr (distances)
    edge_weight = dist                                                 # batch.edge_weight (same distances)
    src = jax.random.randint(ks[2], (E,), 0, N, dtype=jnp.int32)       # edge_index[0] (source j)
    dst = jax.random.randint(ks[3], (E,), 0, N, dtype=jnp.int32)       # edge_index[1] (target i)

    params = dict(
        offset=jnp.linspace(0.0, cutoff, G, dtype=jnp.float32),
        cutoff=cutoff,
        w1e=0.1 * jax.random.normal(ks[4], (G, F), dtype=jnp.float32),   # edge_nn Linear(50, 64)
        b1e=0.1 * jax.random.normal(ks[5], (1, F), dtype=jnp.float32),
        w2e=0.1 * jax.random.normal(ks[6], (F, F), dtype=jnp.float32),   # edge_nn Linear(64, 64)
        b2e=0.1 * jax.random.normal(ks[7], (1, F), dtype=jnp.float32),
        wl1=0.1 * jax.random.normal(ks[8], (D, F), dtype=jnp.float32),   # CFConv.lin1 (no bias)
        wl2=0.1 * jax.random.normal(ks[9], (F, D), dtype=jnp.float32),   # CFConv.lin2
        bl2=0.1 * jax.random.normal(ks[10], (1, D), dtype=jnp.float32),
    )

    x_out = gcn_conv_gnn_layer(x, dist, edge_weight, src, dst, params)
    jax.block_until_ready(x_out)

    x_ref = reference_forward(x, dist, edge_weight, src, dst, params)
    max_err = float(jnp.max(jnp.abs(x_out - x_ref)))
    # bf16 h / msg feeds for the one-hot gather & scatter matmuls -> fp tolerance, not bit-exact
    assert jnp.allclose(x_out, x_ref, atol=5e-2, rtol=5e-2), f"output mismatch, max abs err {max_err}"

    print("KERNEL_OK")
</pallas_src>

<mosaic_0001>
module attributes {stable_mosaic.version = 11 : i64} {
  func.func @edge_filter_gather_kernel(%arg0: i32, %arg1: memref<256x1xf32, #tpu.memory_space<vmem>>, %arg2: memref<256x1xf32, #tpu.memory_space<vmem>>, %arg3: memref<256x1xi32, #tpu.memory_space<vmem>>, %arg4: memref<64x64xbf16, #tpu.memory_space<vmem>>, %arg5: memref<1x128xf32, #tpu.memory_space<vmem>>, %arg6: memref<128x64xf32, #tpu.memory_space<vmem>>, %arg7: memref<1x64xf32, #tpu.memory_space<vmem>>, %arg8: memref<64x64xf32, #tpu.memory_space<vmem>>, %arg9: memref<1x64xf32, #tpu.memory_space<vmem>>, %arg10: memref<256x64xbf16, #tpu.memory_space<vmem>>) attributes {dimension_semantics = [#tpu.dimension_semantics<parallel>], iteration_bounds = array<i64: 1>, scalar_prefetch = 0 : i64, scratch_operands = 0 : i64, tpu.core_type = #tpu.core_type<tc>, window_params = [{transform_indices = @transform_0, window_bounds = array<i64: 256, 1>}, {transform_indices = @transform_1, window_bounds = array<i64: 256, 1>}, {transform_indices = @transform_2, window_bounds = array<i64: 256, 1>}, {pipeline_mode = #tpu.pipeline_mode<synchronous>, transform_indices = @transform_3, window_bounds = array<i64: 64, 64>}, {pipeline_mode = #tpu.pipeline_mode<synchronous>, transform_indices = @transform_4, window_bounds = array<i64: 1, 128>}, {pipeline_mode = #tpu.pipeline_mode<synchronous>, transform_indices = @transform_5, window_bounds = array<i64: 128, 64>}, {pipeline_mode = #tpu.pipeline_mode<synchronous>, transform_indices = @transform_6, window_bounds = array<i64: 1, 64>}, {pipeline_mode = #tpu.pipeline_mode<synchronous>, transform_indices = @transform_7, window_bounds = array<i64: 64, 64>}, {pipeline_mode = #tpu.pipeline_mode<synchronous>, transform_indices = @transform_8, window_bounds = array<i64: 1, 64>}, {transform_indices = @transform_9, window_bounds = array<i64: 256, 64>}]} {
    %c0 = arith.constant 0 : index
    %c0_0 = arith.constant 0 : index
    %0 = vector.load %arg1[%c0, %c0_0] : memref<256x1xf32, #tpu.memory_space<vmem>>, vector<256x1xf32>
    %c0_1 = arith.constant 0 : index
    %c0_2 = arith.constant 0 : index
    %1 = vector.load %arg5[%c0_1, %c0_2] : memref<1x128xf32, #tpu.memory_space<vmem>>, vector<1x128xf32>
    %2 = vector.broadcast %0 : vector<256x1xf32> to vector<256x128xf32>
    %3 = vector.broadcast %1 : vector<1x128xf32> to vector<256x128xf32>
    %4 = arith.subf %2, %3 : vector<256x128xf32>
    %5 = arith.mulf %4, %4 : vector<256x128xf32>
    %cst = arith.constant -48.0200043 : f32
    %6 = vector.broadcast %cst : f32 to vector<256x128xf32>
    %7 = arith.mulf %6, %5 : vector<256x128xf32>
    %8 = math.exp %7 : vector<256x128xf32>
    %c0_3 = arith.constant 0 : index
    %c0_4 = arith.constant 0 : index
    %9 = vector.load %arg6[%c0_3, %c0_4] : memref<128x64xf32, #tpu.memory_space<vmem>>, vector<128x64xf32>
    %cst_5 = arith.constant dense<0.000000e+00> : vector<256x64xf32>
    %10 = tpu.matmul %8, %9, %cst_5 {dimension_numbers = #tpu.dot_dimension_numbers<[1], [0], [0], [1], [0, 0, 1, 1], [], []>} : vector<256x128xf32>, vector<128x64xf32>, vector<256x64xf32> -> vector<256x64xf32>
    %c0_6 = arith.constant 0 : index
    %c0_7 = arith.constant 0 : index
    %11 = vector.load %arg7[%c0_6, %c0_7] : memref<1x64xf32, #tpu.memory_space<vmem>>, vector<1x64xf32>
    %12 = vector.broadcast %11 : vector<1x64xf32> to vector<256x64xf32>
    %13 = arith.addf %10, %12 : vector<256x64xf32>
    %cst_8 = arith.constant 0.000000e+00 : f32
    %14 = vector.broadcast %cst_8 : f32 to vector<256x64xf32>
    %15 = arith.maximumf %13, %14 : vector<256x64xf32>
    %c0_9 = arith.constant 0 : index
    %c0_10 = arith.constant 0 : index
    %16 = vector.load %arg8[%c0_9, %c0_10] : memref<64x64xf32, #tpu.memory_space<vmem>>, vector<64x64xf32>
    %cst_11 = arith.constant dense<0.000000e+00> : vector<256x64xf32>
    %17 = tpu.matmul %15, %16, %cst_11 {dimension_numbers = #tpu.dot_dimension_numbers<[1], [0], [0], [1], [0, 0, 1, 1], [], []>} : vector<256x64xf32>, vector<64x64xf32>, vector<256x64xf32> -> vector<256x64xf32>
    %c0_12 = arith.constant 0 : index
    %c0_13 = arith.constant 0 : index
    %18 = vector.load %arg9[%c0_12, %c0_13] : memref<1x64xf32, #tpu.memory_space<vmem>>, vector<1x64xf32>
    %19 = vector.broadcast %18 : vector<1x64xf32> to vector<256x64xf32>
    %20 = arith.addf %17, %19 : vector<256x64xf32>
    %c0_14 = arith.constant 0 : index
    %c0_15 = arith.constant 0 : index
    %21 = vector.load %arg2[%c0_14, %c0_15] : memref<256x1xf32, #tpu.memory_space<vmem>>, vector<256x1xf32>
    %22 = vector.broadcast %21 : vector<256x1xf32> to vector<256x64xf32>
    %23 = arith.mulf %20, %22 : vector<256x64xf32>
    %c0_16 = arith.constant 0 : index
    %c0_17 = arith.constant 0 : index
    %24 = vector.load %arg3[%c0_16, %c0_17] : memref<256x1xi32, #tpu.memory_space<vmem>>, vector<256x1xi32>
    %25 = tpu.iota {dimensions = array<i32: 1>} : vector<256x64xi32>
    %26 = vector.broadcast %24 : vector<256x1xi32> to vector<256x64xi32>
    %27 = arith.cmpi eq, %25, %26 : vector<256x64xi32>
    %28 = arith.extui %27 : vector<256x64xi1> to vector<256x64xi32>
    %29 = arith.sitofp %28 : vector<256x64xi32> to vector<256x64xf32>
    %30 = arith.truncf %29 : vector<256x64xf32> to vector<256x64xbf16>
    %c0_18 = arith.constant 0 : index
    %c0_19 = arith.constant 0 : index
    %31 = vector.load %arg4[%c0_18, %c0_19] : memref<64x64xbf16, #tpu.memory_space<vmem>>, vector<64x64xbf16>
    %cst_20 = arith.constant dense<0.000000e+00> : vector<256x64xf32>
    %32 = tpu.matmul %30, %31, %cst_20 {dimension_numbers = #tpu.dot_dimension_numbers<[1], [0], [0], [1], [0, 0, 1, 1], [], []>} : vector<256x64xbf16>, vector<64x64xbf16>, vector<256x64xf32> -> vector<256x64xf32>
    %33 = arith.mulf %32, %23 : vector<256x64xf32>
    %34 = arith.truncf %33 : vector<256x64xf32> to vector<256x64xbf16>
    %c0_21 = arith.constant 0 : index
    %c0_22 = arith.constant 0 : index
    %35 = vector.load %arg10[%c0_21, %c0_22] : memref<256x64xbf16, #tpu.memory_space<vmem>>, vector<256x64xbf16>
    tpu.vector_store %arg10[%c0_21, %c0_22], %34 {strides = array<i32>} : memref<256x64xbf16, #tpu.memory_space<vmem>>, vector<256x64xbf16>,
    return
  }
  func.func @transform_0(%arg0: i32) -> (i32, i32) {
    %c0_i32 = arith.constant 0 : i32
    %c0_i32_0 = arith.constant 0 : i32
    return %arg0, %c0_i32 : i32, i32
  }
  func.func @transform_1(%arg0: i32) -> (i32, i32) {
    %c0_i32 = arith.constant 0 : i32
    %c0_i32_0 = arith.constant 0 : i32
    return %arg0, %c0_i32 : i32, i32
  }
  func.func @transform_2(%arg0: i32) -> (i32, i32) {
    %c0_i32 = arith.constant 0 : i32
    %c0_i32_0 = arith.constant 0 : i32
    return %arg0, %c0_i32 : i32, i32
  }
  func.func @transform_3(%arg0: i32) -> (i32, i32) {
    %c0_i32 = arith.constant 0 : i32
    %c0_i32_0 = arith.constant 0 : i32
    %c0_i32_1 = arith.constant 0 : i32
    return %c0_i32, %c0_i32_0 : i32, i32
  }
  func.func @transform_4(%arg0: i32) -> (i32, i32) {
    %c0_i32 = arith.constant 0 : i32
    %c0_i32_0 = arith.constant 0 : i32
    %c0_i32_1 = arith.constant 0 : i32
    return %c0_i32, %c0_i32_0 : i32, i32
  }
  func.func @transform_5(%arg0: i32) -> (i32, i32) {
    %c0_i32 = arith.constant 0 : i32
    %c0_i32_0 = arith.constant 0 : i32
    %c0_i32_1 = arith.constant 0 : i32
    return %c0_i32, %c0_i32_0 : i32, i32
  }
  func.func @transform_6(%arg0: i32) -> (i32, i32) {
    %c0_i32 = arith.constant 0 : i32
    %c0_i32_0 = arith.constant 0 : i32
    %c0_i32_1 = arith.constant 0 : i32
    return %c0_i32, %c0_i32_0 : i32, i32
  }
  func.func @transform_7(%arg0: i32) -> (i32, i32) {
    %c0_i32 = arith.constant 0 : i32
    %c0_i32_0 = arith.constant 0 : i32
    %c0_i32_1 = arith.constant 0 : i32
    return %c0_i32, %c0_i32_0 : i32, i32
  }
  func.func @transform_8(%arg0: i32) -> (i32, i32) {
    %c0_i32 = arith.constant 0 : i32
    %c0_i32_0 = arith.constant 0 : i32
    %c0_i32_1 = arith.constant 0 : i32
    return %c0_i32, %c0_i32_0 : i32, i32
  }
  func.func @transform_9(%arg0: i32) -> (i32, i32) {
    %c0_i32 = arith.constant 0 : i32
    %c0_i32_0 = arith.constant 0 : i32
    return %arg0, %c0_i32 : i32, i32
  }
}

</mosaic_0001>

<llo_original>
// kernel: tpu_custom_call.1
$region0: #{tpu_custom_call.1}
  #allocation0 [shape = 'u32[]', space=smem, size = 0x4, offset = 0x4, fixed_abs, tag = 'smem constant byte address 0x4 - core index']
  #allocation1 [shape = 'u32[144,128]{1,0:T(1,128)}', space=vmem, size = 0x12000, scoped, tag = 'internal scratch']
  %s0 = inlined_call_operand.vmem [shape: f32[256,1], index: 0, kind: input, shape index: {}]
  %s1 = inlined_call_operand.vmem [shape: f32[256,1], index: 1, kind: input, shape index: {}]
  %s2 = inlined_call_operand.vmem [shape: s32[256,1], index: 2, kind: input, shape index: {}]
  %s3 = inlined_call_operand.vmem [shape: bf16[64,64], index: 3, kind: input, shape index: {}]
  %s4 = inlined_call_operand.vmem [shape: f32[1,128], index: 4, kind: input, shape index: {}]
  %s5 = inlined_call_operand.vmem [shape: f32[128,64], index: 5, kind: input, shape index: {}]
  %s6 = inlined_call_operand.vmem [shape: f32[1,64], index: 6, kind: input, shape index: {}]
  %s7 = inlined_call_operand.vmem [shape: f32[64,64], index: 7, kind: input, shape index: {}]
  %s8 = inlined_call_operand.vmem [shape: f32[1,64], index: 8, kind: input, shape index: {}]
  %s9 = inlined_call_operand.vmem [shape: bf16[256,64], index: 9, kind: output, shape index: {}]
  %s10 = sld [smem:[#allocation0]]
  $region46: #{tpu_custom_call.1} parent=0
    _
  %s12 = ssub.s32 1, %s10
  %s13 = scalar_select 0, %s12, %s10
  // Predicated region
  $region2: #{tpu_custom_call.1} parent=0 // pred_check
    _
  $region3: #{tpu_custom_call.1} parent=0 // pred_check_branch
    %15 = sbr.rel (0) target = $region5
  $region4: #{tpu_custom_call.1} parent=0 // pred_region
    _
  $region5: #{tpu_custom_call.1} parent=0 // pred_fallthru
    _
  // Predicated region
  $region6: #{tpu_custom_call.1} parent=0 // pred_check
    _
  $region7: #{tpu_custom_call.1} parent=0 // pred_check_branch
    %17 = sbr.rel (0) target = $region9
  $region8: #{tpu_custom_call.1} parent=0 // pred_region
    _
  $region9: #{tpu_custom_call.1} parent=0 // pred_fallthru
    _
  // Predicated region
  $region10: #{tpu_custom_call.1} parent=0 // pred_check
    _
  $region11: #{tpu_custom_call.1} parent=0 // pred_check_branch
    %19 = sbr.rel (0) target = $region13
  $region12: #{tpu_custom_call.1} parent=0 // pred_region
    _
  $region13: #{tpu_custom_call.1} parent=0 // pred_fallthru
    _
  // Predicated region
  $region14: #{tpu_custom_call.1} parent=0 // pred_check
    _
  $region15: #{tpu_custom_call.1} parent=0 // pred_check_branch
    %21 = sbr.rel (0) target = $region17
  $region16: #{tpu_custom_call.1} parent=0 // pred_region
    _
  $region17: #{tpu_custom_call.1} parent=0 // pred_fallthru
    _
  // Predicated region
  $region18: #{tpu_custom_call.1} parent=0 // pred_check
    _
  $region19: #{tpu_custom_call.1} parent=0 // pred_check_branch
    %23 = sbr.rel (0) target = $region21
  $region20: #{tpu_custom_call.1} parent=0 // pred_region
    _
  $region21: #{tpu_custom_call.1} parent=0 // pred_fallthru
    _
  // Predicated region
  $region22: #{tpu_custom_call.1} parent=0 // pred_check
    _
  $region23: #{tpu_custom_call.1} parent=0 // pred_check_branch
    %25 = sbr.rel (0) target = $region25
  $region24: #{tpu_custom_call.1} parent=0 // pred_region
    _
  $region25: #{tpu_custom_call.1} parent=0 // pred_fallthru
    _
  // Predicated region
  $region26: #{tpu_custom_call.1} parent=0 // pred_check
    _
  $region27: #{tpu_custom_call.1} parent=0 // pred_check_branch
    %27 = sbr.rel (0) target = $region29
  $region28: #{tpu_custom_call.1} parent=0 // pred_region
    _
  $region29: #{tpu_custom_call.1} parent=0 // pred_fallthru
    _
  // Predicated region
  $region30: #{tpu_custom_call.1} parent=0 // pred_check
    _
  $region31: #{tpu_custom_call.1} parent=0 // pred_check_branch
    %29 = sbr.rel (0) target = $region33
  $region32: #{tpu_custom_call.1} parent=0 // pred_region
    _
  $region33: #{tpu_custom_call.1} parent=0 // pred_fallthru
    _
  // Predicated region
  $region34: #{tpu_custom_call.1} parent=0 // pred_check
    _
  $region35: #{tpu_custom_call.1} parent=0 // pred_check_branch
    %31 = sbr.rel (0) target = $region37
  $region36: #{tpu_custom_call.1} parent=0 // pred_region
    _
  $region37: #{tpu_custom_call.1} parent=0 // pred_fallthru
    _
  %v33 = vld [vmem:[%s0] sm:$0xff]
  %v34 = vld [vmem:[%s0 + $0x8] sm:$0xff]
  %v35 = vld [vmem:[%s0 + $0x10] sm:$0xff]
  %v36 = vld [vmem:[%s0 + $0x18] sm:$0xff]
  %v37 = vld [vmem:[%s0 + $0x20] sm:$0xff]
  %v38 = vld [vmem:[%s0 + $0x28] sm:$0xff]
  %v39 = vld [vmem:[%s0 + $0x30] sm:$0xff]
  %v40 = vld [vmem:[%s0 + $0x38] sm:$0xff]
  %v41 = vld [vmem:[%s0 + $0x40] sm:$0xff]
  %v42 = vld [vmem:[%s0 + $0x48] sm:$0xff]
  %v43 = vld [vmem:[%s0 + $0x50] sm:$0xff]
  %v44 = vld [vmem:[%s0 + $0x58] sm:$0xff]
  %v45 = vld [vmem:[%s0 + $0x60] sm:$0xff]
  %v46 = vld [vmem:[%s0 + $0x68] sm:$0xff]
  %v47 = vld [vmem:[%s0 + $0x70] sm:$0xff]
  %v48 = vld [vmem:[%s0 + $0x78] sm:$0xff]
  %v49 = vld [vmem:[%s0 + $0x80] sm:$0xff]
  %v50 = vld [vmem:[%s0 + $0x88] sm:$0xff]
  %v51 = vld [vmem:[%s0 + $0x90] sm:$0xff]
  %v52 = vld [vmem:[%s0 + $0x98] sm:$0xff]
  %v53 = vld [vmem:[%s0 + $0xa0] sm:$0xff]
  %v54 = vld [vmem:[%s0 + $0xa8] sm:$0xff]
  %v55 = vld [vmem:[%s0 + $0xb0] sm:$0xff]
  %v56 = vld [vmem:[%s0 + $0xb8] sm:$0xff]
  %v57 = vld [vmem:[%s0 + $0xc0] sm:$0xff]
  %v58 = vld [vmem:[%s0 + $0xc8] sm:$0xff]
  %v59 = vld [vmem:[%s0 + $0xd0] sm:$0xff]
  %v60 = vld [vmem:[%s0 + $0xd8] sm:$0xff]
  %v61 = vld [vmem:[%s0 + $0xe0] sm:$0xff]
  %v62 = vld [vmem:[%s0 + $0xe8] sm:$0xff]
  %v63 = vld [vmem:[%s0 + $0xf0] sm:$0xff]
  %v64 = vld [vmem:[%s0 + $0xf8] sm:$0xff]
  %v65 = vld [vmem:[%s4] sm:$0x1]
  %67 = vset.pattern.permute.xlu0 0
  %68 = vperm.xlu0 %67, %v33
  %v69 = vpop.permute.xlu0 %68
  %72 = vset.pattern.permute.xlu0 0
  %73 = vperm.xlu0 %72, %v34
  %v74 = vpop.permute.xlu0 %73
  %77 = vset.pattern.permute.xlu0 0
  %78 = vperm.xlu0 %77, %v35
  %v79 = vpop.permute.xlu0 %78
  %82 = vset.pattern.permute.xlu0 0
  %83 = vperm.xlu0 %82, %v36
  %v84 = vpop.permute.xlu0 %83
  %87 = vset.pattern.permute.xlu0 0
  %88 = vperm.xlu0 %87, %v37
  %v89 = vpop.permute.xlu0 %88
  %92 = vset.pattern.permute.xlu0 0
  %93 = vperm.xlu0 %92, %v38
  %v94 = vpop.permute.xlu0 %93
  %97 = vset.pattern.permute.xlu0 0
  %98 = vperm.xlu0 %97, %v39
  %v99 = vpop.permute.xlu0 %98
  %102 = vset.pattern.permute.xlu0 0
  %103 = vperm.xlu0 %102, %v40
  %v104 = vpop.permute.xlu0 %103
  %107 = vset.pattern.permute.xlu0 0
  %108 = vperm.xlu0 %107, %v41
  %v109 = vpop.permute.xlu0 %108
  %112 = vset.pattern.permute.xlu0 0
  %113 = vperm.xlu0 %112, %v42
  %v114 = vpop.permute.xlu0 %113
  %117 = vset.pattern.permute.xlu0 0
  %118 = vperm.xlu0 %117, %v43
  %v119 = vpop.permute.xlu0 %118
  %122 = vset.pattern.permute.xlu0 0
  %123 = vperm.xlu0 %122, %v44
  %v124 = vpop.permute.xlu0 %123
  %127 = vset.pattern.permute.xlu0 0
  %128 = vperm.xlu0 %127, %v45
  %v129 = vpop.permute.xlu0 %128
  %132 = vset.pattern.permute.xlu0 0
  %133 = vperm.xlu0 %132, %v46
  %v134 = vpop.permute.xlu0 %133
  %137 = vset.pattern.permute.xlu0 0
  %138 = vperm.xlu0 %137, %v47
  %v139 = vpop.permute.xlu0 %138
  %142 = vset.pattern.permute.xlu0 0
  %143 = vperm.xlu0 %142, %v48
  %v144 = vpop.permute.xlu0 %143
  %147 = vset.pattern.permute.xlu0 0
  %148 = vperm.xlu0 %147, %v49
  %v149 = vpop.permute.xlu0 %148
  %152 = vset.pattern.permute.xlu0 0
  %153 = vperm.xlu0 %152, %v50
  %v154 = vpop.permute.xlu0 %153
  %157 = vset.pattern.permute.xlu0 0
  %158 = vperm.xlu0 %157, %v51
  %v159 = vpop.permute.xlu0 %158
  %162 = vset.pattern.permute.xlu0 0
  %163 = vperm.xlu0 %162, %v52
  %v164 = vpop.permute.xlu0 %163
  %167 = vset.pattern.permute.xlu0 0
  %168 = vperm.xlu0 %167, %v53
  %v169 = vpop.permute.xlu0 %168
  %172 = vset.pattern.permute.xlu0 0
  %173 = vperm.xlu0 %172, %v54
  %v174 = vpop.permute.xlu0 %173
  %177 = vset.pattern.permute.xlu0 0
  %178 = vperm.xlu0 %177, %v55
  %v179 = vpop.permute.xlu0 %178
  %182 = vset.pattern.permute.xlu0 0
  %183 = vperm.xlu0 %182, %v56
  %v184 = vpop.permute.xlu0 %183
  %187 = vset.pattern.permute.xlu0 0
  %188 = vperm.xlu0 %187, %v57
  %v189 = vpop.permute.xlu0 %188
  %192 = vset.pattern.permute.xlu0 0
  %193 = vperm.xlu0 %192, %v58
  %v194 = vpop.permute.xlu0 %193
  %197 = vset.pattern.permute.xlu0 0
  %198 = vperm.xlu0 %197, %v59
  %v199 = vpop.permute.xlu0 %198
  %202 = vset.pattern.permute.xlu0 0
  %203 = vperm.xlu0 %202, %v60
  %v204 = vpop.permute.xlu0 %203
  %207 = vset.pattern.permute.xlu0 0
  %208 = vperm.xlu0 %207, %v61
  %v209 = vpop.permute.xlu0 %208
  %212 = vset.pattern.permute.xlu0 0
  %213 = vperm.xlu0 %212, %v62
  %v214 = vpop.permute.xlu0 %213
  %217 = vset.pattern.permute.xlu0 0
  %218 = vperm.xlu0 %217, %v63
  %v219 = vpop.permute.xlu0 %218
  %222 = vset.pattern.permute.xlu0 0
  %223 = vperm.xlu0 %222, %v64
  %v224 = vpop.permute.xlu0 %223
  %v227 = vlaneseq
  %v228 = vshrl.u32 %v227, 7
  %v229 = vsub.s32 0, %v228
  %v230 = vrot.slane %v65, %v229
  %v232 = vsub.f32 %v69, %v230
  %v233 = vsub.f32 %v74, %v230
  %v234 = vsub.f32 %v79, %v230
  %v235 = vsub.f32 %v84, %v230
  %v236 = vsub.f32 %v89, %v230
  %v237 = vsub.f32 %v94, %v230
  %v238 = vsub.f32 %v99, %v230
  %v239 = vsub.f32 %v104, %v230
  %v240 = vsub.f32 %v109, %v230
  %v241 = vsub.f32 %v114, %v230
  %v242 = vsub.f32 %v119, %v230
  %v243 = vsub.f32 %v124, %v230
  %v244 = vsub.f32 %v129, %v230
  %v245 = vsub.f32 %v134, %v230
  %v246 = vsub.f32 %v139, %v230
  %v247 = vsub.f32 %v144, %v230
  %v248 = vsub.f32 %v149, %v230
  %v249 = vsub.f32 %v154, %v230
  %v250 = vsub.f32 %v159, %v230
  %v251 = vsub.f32 %v164, %v230
  %v252 = vsub.f32 %v169, %v230
  %v253 = vsub.f32 %v174, %v230
  %v254 = vsub.f32 %v179, %v230
  %v255 = vsub.f32 %v184, %v230
  %v256 = vsub.f32 %v189, %v230
  %v257 = vsub.f32 %v194, %v230
  %v258 = vsub.f32 %v199, %v230
  %v259 = vsub.f32 %v204, %v230
  %v260 = vsub.f32 %v209, %v230
  %v261 = vsub.f32 %v214, %v230
  %v262 = vsub.f32 %v219, %v230
  %v263 = vsub.f32 %v224, %v230
  %v264 = vmul.f32 %v232, %v232
  %v265 = vmul.f32 %v233, %v233
  %v266 = vmul.f32 %v234, %v234
  %v267 = vmul.f32 %v235, %v235
  %v268 = vmul.f32 %v236, %v236
  %v269 = vmul.f32 %v237, %v237
  %v270 = vmul.f32 %v238, %v238
  %v271 = vmul.f32 %v239, %v239
  %v272 = vmul.f32 %v240, %v240
  %v273 = vmul.f32 %v241, %v241
  %v274 = vmul.f32 %v242, %v242
  %v275 = vmul.f32 %v243, %v243
  %v276 = vmul.f32 %v244, %v244
  %v277 = vmul.f32 %v245, %v245
  %v278 = vmul.f32 %v246, %v246
  %v279 = vmul.f32 %v247, %v247
  %v280 = vmul.f32 %v248, %v248
  %v281 = vmul.f32 %v249, %v249
  %v282 = vmul.f32 %v250, %v250
  %v283 = vmul.f32 %v251, %v251
  %v284 = vmul.f32 %v252, %v252
  %v285 = vmul.f32 %v253, %v253
  %v286 = vmul.f32 %v254, %v254
  %v287 = vmul.f32 %v255, %v255
  %v288 = vmul.f32 %v256, %v256
  %v289 = vmul.f32 %v257, %v257
  %v290 = vmul.f32 %v258, %v258
  %v291 = vmul.f32 %v259, %v259
  %v292 = vmul.f32 %v260, %v260
  %v293 = vmul.f32 %v261, %v261
  %v294 = vmul.f32 %v262, %v262
  %v295 = vmul.f32 %v263, %v263
  %v296 = vmul.f32 %v264, -48.020004
  %v297 = vmul.f32 %v265, -48.020004
  %v298 = vmul.f32 %v266, -48.020004
  %v299 = vmul.f32 %v267, -48.020004
  %v300 = vmul.f32 %v268, -48.020004
  %v301 = vmul.f32 %v269, -48.020004
  %v302 = vmul.f32 %v270, -48.020004
  %v303 = vmul.f32 %v271, -48.020004
  %v304 = vmul.f32 %v272, -48.020004
  %v305 = vmul.f32 %v273, -48.020004
  %v306 = vmul.f32 %v274, -48.020004
  %v307 = vmul.f32 %v275, -48.020004
  %v308 = vmul.f32 %v276, -48.020004
  %v309 = vmul.f32 %v277, -48.020004
  %v310 = vmul.f32 %v278, -48.020004
  %v311 = vmul.f32 %v279, -48.020004
  %v312 = vmul.f32 %v280, -48.020004
  %v313 = vmul.f32 %v281, -48.020004
  %v314 = vmul.f32 %v282, -48.020004
  %v315 = vmul.f32 %v283, -48.020004
  %v316 = vmul.f32 %v284, -48.020004
  %v317 = vmul.f32 %v285, -48.020004
  %v318 = vmul.f32 %v286, -48.020004
  %v319 = vmul.f32 %v287, -48.020004
  %v320 = vmul.f32 %v288, -48.020004
  %v321 = vmul.f32 %v289, -48.020004
  %v322 = vmul.f32 %v290, -48.020004
  %v323 = vmul.f32 %v291, -48.020004
  %v324 = vmul.f32 %v292, -48.020004
  %v325 = vmul.f32 %v293, -48.020004
  %v326 = vmul.f32 %v294, -48.020004
  %v327 = vmul.f32 %v295, -48.020004
  %v328 = vmul.f32 %v296, 1.442695
  %v329 = vpow.pop %v328
  %v330 = vmul.f32 %v297, 1.442695
  %v331 = vpow.pop %v330
  %v332 = vmul.f32 %v298, 1.442695
  %v333 = vpow.pop %v332
  %v334 = vmul.f32 %v299, 1.442695
  %v335 = vpow.pop %v334
  %v336 = vmul.f32 %v300, 1.442695
  %v337 = vpow.pop %v336
  %v338 = vmul.f32 %v301, 1.442695
  %v339 = vpow.pop %v338
  %v340 = vmul.f32 %v302, 1.442695
  %v341 = vpow.pop %v340
  %v342 = vmul.f32 %v303, 1.442695
  %v343 = vpow.pop %v342
  %v344 = vmul.f32 %v304, 1.442695
  %v345 = vpow.pop %v344
  %v346 = vmul.f32 %v305, 1.442695
  %v347 = vpow.pop %v346
  %v348 = vmul.f32 %v306, 1.442695
  %v349 = vpow.pop %v348
  %v350 = vmul.f32 %v307, 1.442695
  %v351 = vpow.pop %v350
  %v352 = vmul.f32 %v308, 1.442695
  %v353 = vpow.pop %v352
  %v354 = vmul.f32 %v309, 1.442695
  %v355 = vpow.pop %v354
  %v356 = vmul.f32 %v310, 1.442695
  %v357 = vpow.pop %v356
  %v358 = vmul.f32 %v311, 1.442695
  %v359 = vpow.pop %v358
  %v360 = vmul.f32 %v312, 1.442695
  %v361 = vpow.pop %v360
  %v362 = vmul.f32 %v313, 1.442695
  %v363 = vpow.pop %v362
  %v364 = vmul.f32 %v314, 1.442695
  %v365 = vpow.pop %v364
  %v366 = vmul.f32 %v315, 1.442695
  %v367 = vpow.pop %v366
  %v368 = vmul.f32 %v316, 1.442695
  %v369 = vpow.pop %v368
  %v370 = vmul.f32 %v317, 1.442695
  %v371 = vpow.pop %v370
  %v372 = vmul.f32 %v318, 1.442695
  %v373 = vpow.pop %v372
  %v374 = vmul.f32 %v319, 1.442695
  %v375 = vpow.pop %v374
  %v376 = vmul.f32 %v320, 1.442695
  %v377 = vpow.pop %v376
  %v378 = vmul.f32 %v321, 1.442695
  %v379 = vpow.pop %v378
  %v380 = vmul.f32 %v322, 1.442695
  %v381 = vpow.pop %v380
  %v382 = vmul.f32 %v323, 1.442695
  %v383 = vpow.pop %v382
  %v384 = vmul.f32 %v324, 1.442695
  %v385 = vpow.pop %v384
  %v386 = vmul.f32 %v325, 1.442695
  %v387 = vpow.pop %v386
  %v388 = vmul.f32 %v326, 1.442695
  %v389 = vpow.pop %v388
  %v390 = vmul.f32 %v327, 1.442695
  %v391 = vpow.pop %v390
  %v392 = vld [vmem:[%s5] sm:$0xff]
  %v393 = vld [vmem:[%s5 + $0x8] sm:$0xff]
  %v394 = vld [vmem:[%s5 + $0x10] sm:$0xff]
  %v395 = vld [vmem:[%s5 + $0x18] sm:$0xff]
  %v396 = vld [vmem:[%s5 + $0x20] sm:$0xff]
  %v397 = vld [vmem:[%s5 + $0x28] sm:$0xff]
  %v398 = vld [vmem:[%s5 + $0x30] sm:$0xff]
  %v399 = vld [vmem:[%s5 + $0x38] sm:$0xff]
  %v400 = vld [vmem:[%s5 + $0x40] sm:$0xff]
  %v401 = vld [vmem:[%s5 + $0x48] sm:$0xff]
  %v402 = vld [vmem:[%s5 + $0x50] sm:$0xff]
  %v403 = vld [vmem:[%s5 + $0x58] sm:$0xff]
  %v404 = vld [vmem:[%s5 + $0x60] sm:$0xff]
  %v405 = vld [vmem:[%s5 + $0x68] sm:$0xff]
  %v406 = vld [vmem:[%s5 + $0x70] sm:$0xff]
  %v407 = vld [vmem:[%s5 + $0x78] sm:$0xff]
  %v408 = vld [vmem:[%s6] sm:$0x1]
  %v410 = vlaneseq
  %v411 = vshrl.u32 %v410, 7
  %v412 = vsub.s32 0, %v411
  %v413 = vrot.slane %v408, %v412
  %415 = vmatprep.subr.mxu0 0.0
  %416 = vmatpush1.msra.mxu0 %v392
  %417 = vmatprep.subr.mxu0 0.0
  %418 = vmatpush1.msra.mxu0 %v393
  %419 = vmatprep.subr.mxu0 0.0
  %420 = vmatpush1.msra.mxu0 %v394
  %421 = vmatprep.subr.mxu0 0.0
  %422 = vmatpush1.msra.mxu0 %v395
  %423 = vmatprep.subr.mxu0 0.0
  %424 = vmatpush1.msra.mxu0 %v396
  %425 = vmatprep.subr.mxu0 0.0
  %426 = vmatpush1.msra.mxu0 %v397
  %427 = vmatprep.subr.mxu0 0.0
  %428 = vmatpush1.msra.mxu0 %v398
  %429 = vmatprep.subr.mxu0 0.0
  %430 = vmatpush1.msra.mxu0 %v399
  %431 = vmatprep.subr.mxu0 0.0
  %432 = vmatpush1.msra.mxu0 %v400
  %433 = vmatprep.subr.mxu0 0.0
  %434 = vmatpush1.msra.mxu0 %v401
  %435 = vmatprep.subr.mxu0 0.0
  %436 = vmatpush1.msra.mxu0 %v402
  %437 = vmatprep.subr.mxu0 0.0
  %438 = vmatpush1.msra.mxu0 %v403
  %439 = vmatprep.subr.mxu0 0.0
  %440 = vmatpush1.msra.mxu0 %v404
  %441 = vmatprep.subr.mxu0 0.0
  %442 = vmatpush1.msra.mxu0 %v405
  %443 = vmatprep.subr.mxu0 0.0
  %444 = vmatpush1.msra.mxu0 %v406
  %445 = vmatprep.subr.mxu0 0.0
  %446 = vmatpush1.msra.mxu0 %v407
  %447 = vmatprep.subr.mxu0 0.0
  %448 = vmatpush1.msra.mxu0 0.0
  %449 = vmatprep.subr.mxu0 0.0
  %450 = vmatpush1.msra.mxu0 0.0
  %451 = vmatprep.subr.mxu0 0.0
  %452 = vmatpush1.msra.mxu0 0.0
  %453 = vmatprep.subr.mxu0 0.0
  %454 = vmatpush1.msra.mxu0 0.0
  %455 = vmatprep.subr.mxu0 0.0
  %456 = vmatpush1.msra.mxu0 0.0
  %457 = vmatprep.subr.mxu0 0.0
  %458 = vmatpush1.msra.mxu0 0.0
  %459 = vmatprep.subr.mxu0 0.0
  %460 = vmatpush1.msra.mxu0 0.0
  %461 = vmatprep.subr.mxu0 0.0
  %462 = vmatpush1.msra.mxu0 0.0
  %463 = vmatprep.subr.mxu0 0.0
  %464 = vmatpush1.msra.mxu0 0.0
  %465 = vmatprep.subr.mxu0 0.0
  %466 = vmatpush1.msra.mxu0 0.0
  %467 = vmatprep.subr.mxu0 0.0
  %468 = vmatpush1.msra.mxu0 0.0
  %469 = vmatprep.subr.mxu0 0.0
  %470 = vmatpush1.msra.mxu0 0.0
  %471 = vmatprep.subr.mxu0 0.0
  %472 = vmatpush1.msra.mxu0 0.0
  %473 = vmatprep.subr.mxu0 0.0
  %474 = vmatpush1.msra.mxu0 0.0
  %475 = vmatprep.subr.mxu0 0.0
  %476 = vmatpush1.msra.mxu0 0.0
  %477 = vmatprep.subr.mxu0 0.0
  %478 = vmatpush1.msra.mxu0 0.0
  %479 = vmatprep.mubr.f32.mxu0 0.0
  %480 = vmatmul.mubr.f32.gmra.mrb[0].mxu0 %v329
  %v481 = vpop.f32.mrb[0].mxu0
  %v482 = vadd.f32 %v413, %v481
  %v483 = vpop.f32.mrb[0].mxu0
  %484 = vmatprep.mubr.f32.mxu0 0.0
  %485 = vmatmul.mubr.f32.gmra.mrb[0].mxu0 %v331
  %v486 = vpop.f32.mrb[0].mxu0
  %v487 = vadd.f32 %v413, %v486
  %v488 = vpop.f32.mrb[0].mxu0
  %489 = vmatprep.mubr.f32.mxu0 0.0
  %490 = vmatmul.mubr.f32.gmra.mrb[0].mxu0 %v333
  %v491 = vpop.f32.mrb[0].mxu0
  %v492 = vadd.f32 %v413, %v491
  %v493 = vpop.f32.mrb[0].mxu0
  %494 = vmatprep.mubr.f32.mxu0 0.0
  %495 = vmatmul.mubr.f32.gmra.mrb[0].mxu0 %v335
  %v496 = vpop.f32.mrb[0].mxu0
  %v497 = vadd.f32 %v413, %v496
  %v498 = vpop.f32.mrb[0].mxu0
  %499 = vmatprep.mubr.f32.mxu0 0.0
  %500 = vmatmul.mubr.f32.gmra.mrb[0].mxu0 %v337
  %v501 = vpop.f32.mrb[0].mxu0
  %v502 = vadd.f32 %v413, %v501
  %v503 = vpop.f32.mrb[0].mxu0
  %504 = vmatprep.mubr.f32.mxu0 0.0
  %505 = vmatmul.mubr.f32.gmra.mrb[0].mxu0 %v339
  %v506 = vpop.f32.mrb[0].mxu0
  %v507 = vadd.f32 %v413, %v506
  %v508 = vpop.f32.mrb[0].mxu0
  %509 = vmatprep.mubr.f32.mxu0 0.0
  %510 = vmatmul.mubr.f32.gmra.mrb[0].mxu0 %v341
  %v511 = vpop.f32.mrb[0].mxu0
  %v512 = vadd.f32 %v413, %v511
  %v513 = vpop.f32.mrb[0].mxu0
  %514 = vmatprep.mubr.f32.mxu0 0.0
  %515 = vmatmul.mubr.f32.gmra.mrb[0].mxu0 %v343
  %v516 = vpop.f32.mrb[0].mxu0
  %v517 = vadd.f32 %v413, %v516
  %v518 = vpop.f32.mrb[0].mxu0
  %519 = vmatprep.mubr.f32.mxu0 0.0
  %520 = vmatmul.mubr.f32.gmra.mrb[0].mxu0 %v345
  %v521 = vpop.f32.mrb[0].mxu0
  %v522 = vadd.f32 %v413, %v521
  %v523 = vpop.f32.mrb[0].mxu0
  %524 = vmatprep.mubr.f32.mxu0 0.0
  %525 = vmatmul.mubr.f32.gmra.mrb[0].mxu0 %v347
  %v526 = vpop.f32.mrb[0].mxu0
  %v527 = vadd.f32 %v413, %v526
  %v528 = vpop.f32.mrb[0].mxu0
  %529 = vmatprep.mubr.f32.mxu0 0.0
  %530 = vmatmul.mubr.f32.gmra.mrb[0].mxu0 %v349
  %v531 = vpop.f32.mrb[0].mxu0
  %v532 = vadd.f32 %v413, %v531
  %v533 = vpop.f32.mrb[0].mxu0
  %534 = vmatprep.mubr.f32.mxu0 0.0
  %535 = vmatmul.mubr.f32.gmra.mrb[0].mxu0 %v351
  %v536 = vpop.f32.mrb[0].mxu0
  %v537 = vadd.f32 %v413, %v536
  %v538 = vpop.f32.mrb[0].mxu0
  %539 = vmatprep.mubr.f32.mxu0 0.0
  %540 = vmatmul.mubr.f32.gmra.mrb[0].mxu0 %v353
  %v541 = vpop.f32.mrb[0].mxu0
  %v542 = vadd.f32 %v413, %v541
  %v543 = vpop.f32.mrb[0].mxu0
  %544 = vmatprep.mubr.f32.mxu0 0.0
  %545 = vmatmul.mubr.f32.gmra.mrb[0].mxu0 %v355
  %v546 = vpop.f32.mrb[0].mxu0
  %v547 = vadd.f32 %v413, %v546
  %v548 = vpop.f32.mrb[0].mxu0
  %549 = vmatprep.mubr.f32.mxu0 0.0
  %550 = vmatmul.mubr.f32.gmra.mrb[0].mxu0 %v357
  %v551 = vpop.f32.mrb[0].mxu0
  %v552 = vadd.f32 %v413, %v551
  %v553 = vpop.f32.mrb[0].mxu0
  %554 = vmatprep.mubr.f32.mxu0 0.0
  %555 = vmatmul.mubr.f32.gmra.mrb[0].mxu0 %v359
  %v556 = vpop.f32.mrb[0].mxu0
  %v557 = vadd.f32 %v413, %v556
  %v558 = vpop.f32.mrb[0].mxu0
  %559 = vmatprep.mubr.f32.mxu0 0.0
  %560 = vmatmul.mubr.f32.gmra.mrb[0].mxu0 %v361
  %v561 = vpop.f32.mrb[0].mxu0
  %v562 = vadd.f32 %v413, %v561
  %v563 = vpop.f32.mrb[0].mxu0
  %564 = vmatprep.mubr.f32.mxu0 0.0
  %565 = vmatmul.mubr.f32.gmra.mrb[0].mxu0 %v363
  %v566 = vpop.f32.mrb[0].mxu0
  %v567 = vadd.f32 %v413, %v566
  %v568 = vpop.f32.mrb[0].mxu0
  %569 = vmatprep.mubr.f32.mxu0 0.0
  %570 = vmatmul.mubr.f32.gmra.mrb[0].mxu0 %v365
  %v571 = vpop.f32.mrb[0].mxu0
  %v572 = vadd.f32 %v413, %v571
  %v573 = vpop.f32.mrb[0].mxu0
  %574 = vmatprep.mubr.f32.mxu0 0.0
  %575 = vmatmul.mubr.f32.gmra.mrb[0].mxu0 %v367
  %v576 = vpop.f32.mrb[0].mxu0
  %v577 = vadd.f32 %v413, %v576
  %v578 = vpop.f32.mrb[0].mxu0
  %579 = vmatprep.mubr.f32.mxu0 0.0
  %580 = vmatmul.mubr.f32.gmra.mrb[0].mxu0 %v369
  %v581 = vpop.f32.mrb[0].mxu0
  %v582 = vadd.f32 %v413, %v581
  %v583 = vpop.f32.mrb[0].mxu0
  %584 = vmatprep.mubr.f32.mxu0 0.0
  %585 = vmatmul.mubr.f32.gmra.mrb[0].mxu0 %v371
  %v586 = vpop.f32.mrb[0].mxu0
  %v587 = vadd.f32 %v413, %v586
  %v588 = vpop.f32.mrb[0].mxu0
  %589 = vmatprep.mubr.f32.mxu0 0.0
  %590 = vmatmul.mubr.f32.gmra.mrb[0].mxu0 %v373
  %v591 = vpop.f32.mrb[0].mxu0
  %v592 = vadd.f32 %v413, %v591
  %v593 = vpop.f32.mrb[0].mxu0
  %594 = vmatprep.mubr.f32.mxu0 0.0
  %595 = vmatmul.mubr.f32.gmra.mrb[0].mxu0 %v375
  %v596 = vpop.f32.mrb[0].mxu0
  %v597 = vadd.f32 %v413, %v596
  %v598 = vpop.f32.mrb[0].mxu0
  %599 = vmatprep.mubr.f32.mxu0 0.0
  %600 = vmatmul.mubr.f32.gmra.mrb[0].mxu0 %v377
  %v601 = vpop.f32.mrb[0].mxu0
  %v602 = vadd.f32 %v413, %v601
  %v603 = vpop.f32.mrb[0].mxu0
  %604 = vmatprep.mubr.f32.mxu0 0.0
  %605 = vmatmul.mubr.f32.gmra.mrb[0].mxu0 %v379
  %v606 = vpop.f32.mrb[0].mxu0
  %v607 = vadd.f32 %v413, %v606
  %v608 = vpop.f32.mrb[0].mxu0
  %609 = vmatprep.mubr.f32.mxu0 0.0
  %610 = vmatmul.mubr.f32.gmra.mrb[0].mxu0 %v381
  %v611 = vpop.f32.mrb[0].mxu0
  %v612 = vadd.f32 %v413, %v611
  %v613 = vpop.f32.mrb[0].mxu0
  %614 = vmatprep.mubr.f32.mxu0 0.0
  %615 = vmatmul.mubr.f32.gmra.mrb[0].mxu0 %v383
  %v616 = vpop.f32.mrb[0].mxu0
  %v617 = vadd.f32 %v413, %v616
  %v618 = vpop.f32.mrb[0].mxu0
  %619 = vmatprep.mubr.f32.mxu0 0.0
  %620 = vmatmul.mubr.f32.gmra.mrb[0].mxu0 %v385
  %v621 = vpop.f32.mrb[0].mxu0
  %v622 = vadd.f32 %v413, %v621
  %v623 = vpop.f32.mrb[0].mxu0
  %624 = vmatprep.mubr.f32.mxu0 0.0
  %625 = vmatmul.mubr.f32.gmra.mrb[0].mxu0 %v387
  %v626 = vpop.f32.mrb[0].mxu0
  %v627 = vadd.f32 %v413, %v626
  %v628 = vpop.f32.mrb[0].mxu0
  %629 = vmatprep.mubr.f32.mxu0 0.0
  %630 = vmatmul.mubr.f32.gmra.mrb[0].mxu0 %v389
  %v631 = vpop.f32.mrb[0].mxu0
  %v632 = vadd.f32 %v413, %v631
  %v633 = vpop.f32.mrb[0].mxu0
  %634 = vmatprep.mubr.f32.mxu0 0.0
  %635 = vmatmul.mubr.f32.gmra.mrb[0].mxu0 %v391
  %v636 = vpop.f32.mrb[0].mxu0
  %v637 = vadd.f32 %v413, %v636
  %v638 = vpop.f32.mrb[0].mxu0
  %639 = vdwg.mxu0
  %v640 = vmax.f32 %v482, 0.0
  %v641 = vmax.f32 %v487, 0.0
  %v642 = vmax.f32 %v492, 0.0
  %v643 = vmax.f32 %v497, 0.0
  %v644 = vmax.f32 %v502, 0.0
  %v645 = vmax.f32 %v507, 0.0
  %v646 = vmax.f32 %v512, 0.0
  %v647 = vmax.f32 %v517, 0.0
  %v648 = vmax.f32 %v522, 0.0
  %v649 = vmax.f32 %v527, 0.0
  %v650 = vmax.f32 %v532, 0.0
  %v651 = vmax.f32 %v537, 0.0
  %v652 = vmax.f32 %v542, 0.0
  %v653 = vmax.f32 %v547, 0.0
  %v654 = vmax.f32 %v552, 0.0
  %v655 = vmax.f32 %v557, 0.0
  %v656 = vmax.f32 %v562, 0.0
  %v657 = vmax.f32 %v567, 0.0
  %v658 = vmax.f32 %v572, 0.0
  %v659 = vmax.f32 %v577, 0.0
  %v660 = vmax.f32 %v582, 0.0
  %v661 = vmax.f32 %v587, 0.0
  %v662 = vmax.f32 %v592, 0.0
  %v663 = vmax.f32 %v597, 0.0
  %v664 = vmax.f32 %v602, 0.0
  %v665 = vmax.f32 %v607, 0.0
  %v666 = vmax.f32 %v612, 0.0
  %v667 = vmax.f32 %v617, 0.0
  %v668 = vmax.f32 %v622, 0.0
  %v669 = vmax.f32 %v627, 0.0
  %v670 = vmax.f32 %v632, 0.0
  %v671 = vmax.f32 %v637, 0.0
  %v672 = vld [vmem:[%s7] sm:$0xff]
  %v673 = vld [vmem:[%s7 + $0x8] sm:$0xff]
  %v674 = vld [vmem:[%s7 + $0x10] sm:$0xff]
  %v675 = vld [vmem:[%s7 + $0x18] sm:$0xff]
  %v676 = vld [vmem:[%s7 + $0x20] sm:$0xff]
  %v677 = vld [vmem:[%s7 + $0x28] sm:$0xff]
  %v678 = vld [vmem:[%s7 + $0x30] sm:$0xff]
  %v679 = vld [vmem:[%s7 + $0x38] sm:$0xff]
  %v680 = vld [vmem:[%s8] sm:$0x1]
  %v682 = vlaneseq
  %v683 = vshrl.u32 %v682, 7
  %v684 = vsub.s32 0, %v683
  %v685 = vrot.slane %v680, %v684
  %vm687 = vcmask 523264
  %v689 = vsel %vm687, %v640, 0
  %v692 = vsel %vm687, %v641, 0
  %v695 = vsel %vm687, %v642, 0
  %v698 = vsel %vm687, %v643, 0
  %v701 = vsel %vm687, %v644, 0
  %v704 = vsel %vm687, %v645, 0
  %v707 = vsel %vm687, %v646, 0
  %v710 = vsel %vm687, %v647, 0
  %v713 = vsel %vm687, %v648, 0
  %v716 = vsel %vm687, %v649, 0
  %v719 = vsel %vm687, %v650, 0
  %v722 = vsel %vm687, %v651, 0
  %v725 = vsel %vm687, %v652, 0
  %v728 = vsel %vm687, %v653, 0
  %v731 = vsel %vm687, %v654, 0
  %v734 = vsel %vm687, %v655, 0
  %v737 = vsel %vm687, %v656, 0
  %v740 = vsel %vm687, %v657, 0
  %v743 = vsel %vm687, %v658, 0
  %v746 = vsel %vm687, %v659, 0
  %v749 = vsel %vm687, %v660, 0
  %v752 = vsel %vm687, %v661, 0
  %v755 = vsel %vm687, %v662, 0
  %v758 = vsel %vm687, %v663, 0
  %v761 = vsel %vm687, %v664, 0
  %v764 = vsel %vm687, %v665, 0
  %v767 = vsel %vm687, %v666, 0
  %v770 = vsel %vm687, %v667, 0
  %v773 = vsel %vm687, %v668, 0
  %v776 = vsel %vm687, %v669, 0
  %v779 = vsel %vm687, %v670, 0
  %v782 = vsel %vm687, %v671, 0
  %784 = vmatprep.subr.mxu0 0.0
  %785 = vmatpush1.msra.mxu0 %v672
  %786 = vmatprep.subr.mxu0 0.0
  %787 = vmatpush1.msra.mxu0 %v673
  %788 = vmatprep.subr.mxu0 0.0
  %789 = vmatpush1.msra.mxu0 %v674
  %790 = vmatprep.subr.mxu0 0.0
  %791 = vmatpush1.msra.mxu0 %v675
  %792 = vmatprep.subr.mxu0 0.0
  %793 = vmatpush1.msra.mxu0 %v676
  %794 = vmatprep.subr.mxu0 0.0
  %795 = vmatpush1.msra.mxu0 %v677
  %796 = vmatprep.subr.mxu0 0.0
  %797 = vmatpush1.msra.mxu0 %v678
  %798 = vmatprep.subr.mxu0 0.0
  %799 = vmatpush1.msra.mxu0 %v679
  %800 = vmatprep.subr.mxu0 0.0
  %801 = vmatpush1.msra.mxu0 0.0
  %802 = vmatprep.subr.mxu0 0.0
  %803 = vmatpush1.msra.mxu0 0.0
  %804 = vmatprep.subr.mxu0 0.0
  %805 = vmatpush1.msra.mxu0 0.0
  %806 = vmatprep.subr.mxu0 0.0
  %807 = vmatpush1.msra.mxu0 0.0
  %808 = vmatprep.subr.mxu0 0.0
  %809 = vmatpush1.msra.mxu0 0.0
  %810 = vmatprep.subr.mxu0 0.0
  %811 = vmatpush1.msra.mxu0 0.0
  %812 = vmatprep.subr.mxu0 0.0
  %813 = vmatpush1.msra.mxu0 0.0
  %814 = vmatprep.subr.mxu0 0.0
  %815 = vmatpush1.msra.mxu0 0.0
  %816 = vmatprep.subr.mxu0 0.0
  %817 = vmatpush1.msra.mxu0 0.0
  %818 = vmatprep.subr.mxu0 0.0
  %819 = vmatpush1.msra.mxu0 0.0
  %820 = vmatprep.subr.mxu0 0.0
  %821 = vmatpush1.msra.mxu0 0.0
  %822 = vmatprep.subr.mxu0 0.0
  %823 = vmatpush1.msra.mxu0 0.0
  %824 = vmatprep.subr.mxu0 0.0
  %825 = vmatpush1.msra.mxu0 0.0
  %826 = vmatprep.subr.mxu0 0.0
  %827 = vmatpush1.msra.mxu0 0.0
  %828 = vmatprep.subr.mxu0 0.0
  %829 = vmatpush1.msra.mxu0 0.0
  %830 = vmatprep.subr.mxu0 0.0
  %831 = vmatpush1.msra.mxu0 0.0
  %832 = vmatprep.subr.mxu0 0.0
  %833 = vmatpush1.msra.mxu0 0.0
  %834 = vmatprep.subr.mxu0 0.0
  %835 = vmatpush1.msra.mxu0 0.0
  %836 = vmatprep.subr.mxu0 0.0
  %837 = vmatpush1.msra.mxu0 0.0
  %838 = vmatprep.subr.mxu0 0.0
  %839 = vmatpush1.msra.mxu0 0.0
  %840 = vmatprep.subr.mxu0 0.0
  %841 = vmatpush1.msra.mxu0 0.0
  %842 = vmatprep.subr.mxu0 0.0
  %843 = vmatpush1.msra.mxu0 0.0
  %844 = vmatprep.subr.mxu0 0.0
  %845 = vmatpush1.msra.mxu0 0.0
  %846 = vmatprep.subr.mxu0 0.0
  %847 = vmatpush1.msra.mxu0 0.0
  %848 = vmatprep.mubr.f32.mxu0 0.0
  %849 = vmatmul.mubr.f32.gmra.mrb[0].mxu0 %v689
  %v850 = vpop.f32.mrb[0].mxu0
  %v851 = vadd.f32 %v685, %v850
  %v852 = vpop.f32.mrb[0].mxu0
  %853 = vmatprep.mubr.f32.mxu0 0.0
  %854 = vmatmul.mubr.f32.gmra.mrb[0].mxu0 %v692
  %v855 = vpop.f32.mrb[0].mxu0
  %v856 = vadd.f32 %v685, %v855
  %v857 = vpop.f32.mrb[0].mxu0
  %858 = vmatprep.mubr.f32.mxu0 0.0
  %859 = vmatmul.mubr.f32.gmra.mrb[0].mxu0 %v695
  %v860 = vpop.f32.mrb[0].mxu0
  %v861 = vadd.f32 %v685, %v860
  %v862 = vpop.f32.mrb[0].mxu0
  %863 = vmatprep.mubr.f32.mxu0 0.0
  %864 = vmatmul.mubr.f32.gmra.mrb[0].mxu0 %v698
  %v865 = vpop.f32.mrb[0].mxu0
  %v866 = vadd.f32 %v685, %v865
  %v867 = vpop.f32.mrb[0].mxu0
  %868 = vmatprep.mubr.f32.mxu0 0.0
  %869 = vmatmul.mubr.f32.gmra.mrb[0].mxu0 %v701
  %v870 = vpop.f32.mrb[0].mxu0
  %v871 = vadd.f32 %v685, %v870
  %v872 = vpop.f32.mrb[0].mxu0
  %873 = vmatprep.mubr.f32.mxu0 0.0
  %874 = vmatmul.mubr.f32.gmra.mrb[0].mxu0 %v704
  %v875 = vpop.f32.mrb[0].mxu0
  %v876 = vadd.f32 %v685, %v875
  %v877 = vpop.f32.mrb[0].mxu0
  %878 = vmatprep.mubr.f32.mxu0 0.0
  %879 = vmatmul.mubr.f32.gmra.mrb[0].mxu0 %v707
  %v880 = vpop.f32.mrb[0].mxu0
  %v881 = vadd.f32 %v685, %v880
  %v882 = vpop.f32.mrb[0].mxu0
  %883 = vmatprep.mubr.f32.mxu0 0.0
  %884 = vmatmul.mubr.f32.gmra.mrb[0].mxu0 %v710
  %v885 = vpop.f32.mrb[0].mxu0
  %v886 = vadd.f32 %v685, %v885
  %v887 = vpop.f32.mrb[0].mxu0
  %888 = vmatprep.mubr.f32.mxu0 0.0
  %889 = vmatmul.mubr.f32.gmra.mrb[0].mxu0 %v713
  %v890 = vpop.f32.mrb[0].mxu0
  %v891 = vadd.f32 %v685, %v890
  %v892 = vpop.f32.mrb[0].mxu0
  %893 = vmatprep.mubr.f32.mxu0 0.0
  %894 = vmatmul.mubr.f32.gmra.mrb[0].mxu0 %v716
  %v895 = vpop.f32.mrb[0].mxu0
  %v896 = vadd.f32 %v685, %v895
  %v897 = vpop.f32.mrb[0].mxu0
  %898 = vmatprep.mubr.f32.mxu0 0.0
  %899 = vmatmul.mubr.f32.gmra.mrb[0].mxu0 %v719
  %v900 = vpop.f32.mrb[0].mxu0
  %v901 = vadd.f32 %v685, %v900
  %v902 = vpop.f32.mrb[0].mxu0
  %903 = vmatprep.mubr.f32.mxu0 0.0
  %904 = vmatmul.mubr.f32.gmra.mrb[0].mxu0 %v722
  %v905 = vpop.f32.mrb[0].mxu0
  %v906 = vadd.f32 %v685, %v905
  %v907 = vpop.f32.mrb[0].mxu0
  %908 = vmatprep.mubr.f32.mxu0 0.0
  %909 = vmatmul.mubr.f32.gmra.mrb[0].mxu0 %v725
  %v910 = vpop.f32.mrb[0].mxu0
  %v911 = vadd.f32 %v685, %v910
  %v912 = vpop.f32.mrb[0].mxu0
  %913 = vmatprep.mubr.f32.mxu0 0.0
  %914 = vmatmul.mubr.f32.gmra.mrb[0].mxu0 %v728
  %v915 = vpop.f32.mrb[0].mxu0
  %v916 = vadd.f32 %v685, %v915
  %v917 = vpop.f32.mrb[0].mxu0
  %918 = vmatprep.mubr.f32.mxu0 0.0
  %919 = vmatmul.mubr.f32.gmra.mrb[0].mxu0 %v731
  %v920 = vpop.f32.mrb[0].mxu0
  %v921 = vadd.f32 %v685, %v920
  %v922 = vpop.f32.mrb[0].mxu0
  %923 = vmatprep.mubr.f32.mxu0 0.0
  %924 = vmatmul.mubr.f32.gmra.mrb[0].mxu0 %v734
  %v925 = vpop.f32.mrb[0].mxu0
  %v926 = vadd.f32 %v685, %v925
  %v927 = vpop.f32.mrb[0].mxu0
  %928 = vmatprep.mubr.f32.mxu0 0.0
  %929 = vmatmul.mubr.f32.gmra.mrb[0].mxu0 %v737
  %v930 = vpop.f32.mrb[0].mxu0
  %v931 = vadd.f32 %v685, %v930
  %v932 = vpop.f32.mrb[0].mxu0
  %933 = vmatprep.mubr.f32.mxu0 0.0
  %934 = vmatmul.mubr.f32.gmra.mrb[0].mxu0 %v740
  %v935 = vpop.f32.mrb[0].mxu0
  %v936 = vadd.f32 %v685, %v935
  %v937 = vpop.f32.mrb[0].mxu0
  %938 = vmatprep.mubr.f32.mxu0 0.0
  %939 = vmatmul.mubr.f32.gmra.mrb[0].mxu0 %v743
  %v940 = vpop.f32.mrb[0].mxu0
  %v941 = vadd.f32 %v685, %v940
  %v942 = vpop.f32.mrb[0].mxu0
  %943 = vmatprep.mubr.f32.mxu0 0.0
  %944 = vmatmul.mubr.f32.gmra.mrb[0].mxu0 %v746
  %v945 = vpop.f32.mrb[0].mxu0
  %v946 = vadd.f32 %v685, %v945
  %v947 = vpop.f32.mrb[0].mxu0
  %948 = vmatprep.mubr.f32.mxu0 0.0
  %949 = vmatmul.mubr.f32.gmra.mrb[0].mxu0 %v749
  %v950 = vpop.f32.mrb[0].mxu0
  %v951 = vadd.f32 %v685, %v950
  %v952 = vpop.f32.mrb[0].mxu0
  %953 = vmatprep.mubr.f32.mxu0 0.0
  %954 = vmatmul.mubr.f32.gmra.mrb[0].mxu0 %v752
  %v955 = vpop.f32.mrb[0].mxu0
  %v956 = vadd.f32 %v685, %v955
  %v957 = vpop.f32.mrb[0].mxu0
  %958 = vmatprep.mubr.f32.mxu0 0.0
  %959 = vmatmul.mubr.f32.gmra.mrb[0].mxu0 %v755
  %v960 = vpop.f32.mrb[0].mxu0
  %v961 = vadd.f32 %v685, %v960
  %v962 = vpop.f32.mrb[0].mxu0
  %963 = vmatprep.mubr.f32.mxu0 0.0
  %964 = vmatmul.mubr.f32.gmra.mrb[0].mxu0 %v758
  %v965 = vpop.f32.mrb[0].mxu0
  %v966 = vadd.f32 %v685, %v965
  %v967 = vpop.f32.mrb[0].mxu0
  %968 = vmatprep.mubr.f32.mxu0 0.0
  %969 = vmatmul.mubr.f32.gmra.mrb[0].mxu0 %v761
  %v970 = vpop.f32.mrb[0].mxu0
  %v971 = vadd.f32 %v685, %v970
  %v972 = vpop.f32.mrb[0].mxu0
  %973 = vmatprep.mubr.f32.mxu0 0.0
  %974 = vmatmul.mubr.f32.gmra.mrb[0].mxu0 %v764
  %v975 = vpop.f32.mrb[0].mxu0
  %v976 = vadd.f32 %v685, %v975
  %v977 = vpop.f32.mrb[0].mxu0
  %978 = vmatprep.mubr.f32.mxu0 0.0
  %979 = vmatmul.mubr.f32.gmra.mrb[0].mxu0 %v767
  %v980 = vpop.f32.mrb[0].mxu0
  %v981 = vadd.f32 %v685, %v980
  %v982 = vpop.f32.mrb[0].mxu0
  %983 = vmatprep.mubr.f32.mxu0 0.0
  %984 = vmatmul.mubr.f32.gmra.mrb[0].mxu0 %v770
  %v985 = vpop.f32.mrb[0].mxu0
  %v986 = vadd.f32 %v685, %v985
  %v987 = vpop.f32.mrb[0].mxu0
  %988 = vmatprep.mubr.f32.mxu0 0.0
  %989 = vmatmul.mubr.f32.gmra.mrb[0].mxu0 %v773
  %v990 = vpop.f32.mrb[0].mxu0
  %v991 = vadd.f32 %v685, %v990
  %v992 = vpop.f32.mrb[0].mxu0
  %993 = vmatprep.mubr.f32.mxu0 0.0
  %994 = vmatmul.mubr.f32.gmra.mrb[0].mxu0 %v776
  %v995 = vpop.f32.mrb[0].mxu0
  %v996 = vadd.f32 %v685, %v995
  %v997 = vpop.f32.mrb[0].mxu0
  %998 = vmatprep.mubr.f32.mxu0 0.0
  %999 = vmatmul.mubr.f32.gmra.mrb[0].mxu0 %v779
  %v1000 = vpop.f32.mrb[0].mxu0
  %v1001 = vadd.f32 %v685, %v1000
  %v1002 = vpop.f32.mrb[0].mxu0
  %1003 = vmatprep.mubr.f32.mxu0 0.0
  %1004 = vmatmul.mubr.f32.gmra.mrb[0].mxu0 %v782
  %v1005 = vpop.f32.mrb[0].mxu0
  %v1006 = vadd.f32 %v685, %v1005
  %v1007 = vpop.f32.mrb[0].mxu0
  %1008 = vdwg.mxu0
  %v1009 = vld [vmem:[%s1] sm:$0xff]
  %v1010 = vld [vmem:[%s1 + $0x8] sm:$0xff]
  %v1011 = vld [vmem:[%s1 + $0x10] sm:$0xff]
  %v1012 = vld [vmem:[%s1 + $0x18] sm:$0xff]
  %v1013 = vld [vmem:[%s1 + $0x20] sm:$0xff]
  %v1014 = vld [vmem:[%s1 + $0x28] sm:$0xff]
  %v1015 = vld [vmem:[%s1 + $0x30] sm:$0xff]
  %v1016 = vld [vmem:[%s1 + $0x38] sm:$0xff]
  %v1017 = vld [vmem:[%s1 + $0x40] sm:$0xff]
  %v1018 = vld [vmem:[%s1 + $0x48] sm:$0xff]
  %v1019 = vld [vmem:[%s1 + $0x50] sm:$0xff]
  %v1020 = vld [vmem:[%s1 + $0x58] sm:$0xff]
  %v1021 = vld [vmem:[%s1 + $0x60] sm:$0xff]
  %v1022 = vld [vmem:[%s1 + $0x68] sm:$0xff]
  %v1023 = vld [vmem:[%s1 + $0x70] sm:$0xff]
  %v1024 = vld [vmem:[%s1 + $0x78] sm:$0xff]
  %v1025 = vld [vmem:[%s1 + $0x80] sm:$0xff]
  %v1026 = vld [vmem:[%s1 + $0x88] sm:$0xff]
  %v1027 = vld [vmem:[%s1 + $0x90] sm:$0xff]
  %v1028 = vld [vmem:[%s1 + $0x98] sm:$0xff]
  %v1029 = vld [vmem:[%s1 + $0xa0] sm:$0xff]
  %v1030 = vld [vmem:[%s1 + $0xa8] sm:$0xff]
  %v1031 = vld [vmem:[%s1 + $0xb0] sm:$0xff]
  %v1032 = vld [vmem:[%s1 + $0xb8] sm:$0xff]
  %v1033 = vld [vmem:[%s1 + $0xc0] sm:$0xff]
  %v1034 = vld [vmem:[%s1 + $0xc8] sm:$0xff]
  %v1035 = vld [vmem:[%s1 + $0xd0] sm:$0xff]
  %v1036 = vld [vmem:[%s1 + $0xd8] sm:$0xff]
  %v1037 = vld [vmem:[%s1 + $0xe0] sm:$0xff]
  %v1038 = vld [vmem:[%s1 + $0xe8] sm:$0xff]
  %v1039 = vld [vmem:[%s1 + $0xf0] sm:$0xff]
  %v1040 = vld [vmem:[%s1 + $0xf8] sm:$0xff]
  %1042 = vset.pattern.permute.xlu0 0
  %1043 = vperm.xlu0 %1042, %v1009
  %v1044 = vpop.permute.xlu0 %1043
  %1047 = vset.pattern.permute.xlu0 0
  %1048 = vperm.xlu0 %1047, %v1010
  %v1049 = vpop.permute.xlu0 %1048
  %1052 = vset.pattern.permute.xlu0 0
  %1053 = vperm.xlu0 %1052, %v1011
  %v1054 = vpop.permute.xlu0 %1053
  %1057 = vset.pattern.permute.xlu0 0
  %1058 = vperm.xlu0 %1057, %v1012
  %v1059 = vpop.permute.xlu0 %1058
  %1062 = vset.pattern.permute.xlu0 0
  %1063 = vperm.xlu0 %1062, %v1013
  %v1064 = vpop.permute.xlu0 %1063
  %1067 = vset.pattern.permute.xlu0 0
  %1068 = vperm.xlu0 %1067, %v1014
  %v1069 = vpop.permute.xlu0 %1068
  %1072 = vset.pattern.permute.xlu0 0
  %1073 = vperm.xlu0 %1072, %v1015
  %v1074 = vpop.permute.xlu0 %1073
  %1077 = vset.pattern.permute.xlu0 0
  %1078 = vperm.xlu0 %1077, %v1016
  %v1079 = vpop.permute.xlu0 %1078
  %1082 = vset.pattern.permute.xlu0 0
  %1083 = vperm.xlu0 %1082, %v1017
  %v1084 = vpop.permute.xlu0 %1083
  %1087 = vset.pattern.permute.xlu0 0
  %1088 = vperm.xlu0 %1087, %v1018
  %v1089 = vpop.permute.xlu0 %1088
  %1092 = vset.pattern.permute.xlu0 0
  %1093 = vperm.xlu0 %1092, %v1019
  %v1094 = vpop.permute.xlu0 %1093
  %1097 = vset.pattern.permute.xlu0 0
  %1098 = vperm.xlu0 %1097, %v1020
  %v1099 = vpop.permute.xlu0 %1098
  %1102 = vset.pattern.permute.xlu0 0
  %1103 = vperm.xlu0 %1102, %v1021
  %v1104 = vpop.permute.xlu0 %1103
  %1107 = vset.pattern.permute.xlu0 0
  %1108 = vperm.xlu0 %1107, %v1022
  %v1109 = vpop.permute.xlu0 %1108
  %1112 = vset.pattern.permute.xlu0 0
  %1113 = vperm.xlu0 %1112, %v1023
  %v1114 = vpop.permute.xlu0 %1113
  %1117 = vset.pattern.permute.xlu0 0
  %1118 = vperm.xlu0 %1117, %v1024
  %v1119 = vpop.permute.xlu0 %1118
  %1122 = vset.pattern.permute.xlu0 0
  %1123 = vperm.xlu0 %1122, %v1025
  %v1124 = vpop.permute.xlu0 %1123
  %1127 = vset.pattern.permute.xlu0 0
  %1128 = vperm.xlu0 %1127, %v1026
  %v1129 = vpop.permute.xlu0 %1128
  %1132 = vset.pattern.permute.xlu0 0
  %1133 = vperm.xlu0 %1132, %v1027
  %v1134 = vpop.permute.xlu0 %1133
  %1137 = vset.pattern.permute.xlu0 0
  %1138 = vperm.xlu0 %1137, %v1028
  %v1139 = vpop.permute.xlu0 %1138
  %1142 = vset.pattern.permute.xlu0 0
  %1143 = vperm.xlu0 %1142, %v1029
  %v1144 = vpop.permute.xlu0 %1143
  %1147 = vset.pattern.permute.xlu0 0
  %1148 = vperm.xlu0 %1147, %v1030
  %v1149 = vpop.permute.xlu0 %1148
  %1152 = vset.pattern.permute.xlu0 0
  %1153 = vperm.xlu0 %1152, %v1031
  %v1154 = vpop.permute.xlu0 %1153
  %1157 = vset.pattern.permute.xlu0 0
  %1158 = vperm.xlu0 %1157, %v1032
  %v1159 = vpop.permute.xlu0 %1158
  %1162 = vset.pattern.permute.xlu0 0
  %1163 = vperm.xlu0 %1162, %v1033
  %v1164 = vpop.permute.xlu0 %1163
  %1167 = vset.pattern.permute.xlu0 0
  %1168 = vperm.xlu0 %1167, %v1034
  %v1169 = vpop.permute.xlu0 %1168
  %1172 = vset.pattern.permute.xlu0 0
  %1173 = vperm.xlu0 %1172, %v1035
  %v1174 = vpop.permute.xlu0 %1173
  %1177 = vset.pattern.permute.xlu0 0
  %1178 = vperm.xlu0 %1177, %v1036
  %v1179 = vpop.permute.xlu0 %1178
  %1182 = vset.pattern.permute.xlu0 0
  %1183 = vperm.xlu0 %1182, %v1037
  %v1184 = vpop.permute.xlu0 %1183
  %1187 = vset.pattern.permute.xlu0 0
  %1188 = vperm.xlu0 %1187, %v1038
  %v1189 = vpop.permute.xlu0 %1188
  %1192 = vset.pattern.permute.xlu0 0
  %1193 = vperm.xlu0 %1192, %v1039
  %v1194 = vpop.permute.xlu0 %1193
  %1197 = vset.pattern.permute.xlu0 0
  %1198 = vperm.xlu0 %1197, %v1040
  %v1199 = vpop.permute.xlu0 %1198
  %v1201 = vmul.f32 %v851, %v1044
  %v1202 = vmul.f32 %v856, %v1049
  %v1203 = vmul.f32 %v861, %v1054
  %v1204 = vmul.f32 %v866, %v1059
  %v1205 = vmul.f32 %v871, %v1064
  %v1206 = vmul.f32 %v876, %v1069
  %v1207 = vmul.f32 %v881, %v1074
  %v1208 = vmul.f32 %v886, %v1079
  %v1209 = vmul.f32 %v891, %v1084
  %v1210 = vmul.f32 %v896, %v1089
  %v1211 = vmul.f32 %v901, %v1094
  %v1212 = vmul.f32 %v906, %v1099
  %v1213 = vmul.f32 %v911, %v1104
  %v1214 = vmul.f32 %v916, %v1109
  %v1215 = vmul.f32 %v921, %v1114
  %v1216 = vmul.f32 %v926, %v1119
  %v1217 = vmul.f32 %v931, %v1124
  %v1218 = vmul.f32 %v936, %v1129
  %v1219 = vmul.f32 %v941, %v1134
  %v1220 = vmul.f32 %v946, %v1139
  %v1221 = vmul.f32 %v951, %v1144
  %v1222 = vmul.f32 %v956, %v1149
  %v1223 = vmul.f32 %v961, %v1154
  %v1224 = vmul.f32 %v966, %v1159
  %v1225 = vmul.f32 %v971, %v1164
  %v1226 = vmul.f32 %v976, %v1169
  %v1227 = vmul.f32 %v981, %v1174
  %v1228 = vmul.f32 %v986, %v1179
  %v1229 = vmul.f32 %v991, %v1184
  %v1230 = vmul.f32 %v996, %v1189
  %v1231 = vmul.f32 %v1001, %v1194
  %v1232 = vmul.f32 %v1006, %v1199
  %v1233 = vld [vmem:[%s2] sm:$0xff]
  %v1234 = vld [vmem:[%s2 + $0x8] sm:$0xff]
  %v1235 = vld [vmem:[%s2 + $0x10] sm:$0xff]
  %v1236 = vld [vmem:[%s2 + $0x18] sm:$0xff]
  %v1237 = vld [vmem:[%s2 + $0x20] sm:$0xff]
  %v1238 = vld [vmem:[%s2 + $0x28] sm:$0xff]
  %v1239 = vld [vmem:[%s2 + $0x30] sm:$0xff]
  %v1240 = vld [vmem:[%s2 + $0x38] sm:$0xff]
  %v1241 = vld [vmem:[%s2 + $0x40] sm:$0xff]
  %v1242 = vld [vmem:[%s2 + $0x48] sm:$0xff]
  %v1243 = vld [vmem:[%s2 + $0x50] sm:$0xff]
  %v1244 = vld [vmem:[%s2 + $0x58] sm:$0xff]
  %v1245 = vld [vmem:[%s2 + $0x60] sm:$0xff]
  %v1246 = vld [vmem:[%s2 + $0x68] sm:$0xff]
  %v1247 = vld [vmem:[%s2 + $0x70] sm:$0xff]
  %v1248 = vld [vmem:[%s2 + $0x78] sm:$0xff]
  %v1249 = vld [vmem:[%s2 + $0x80] sm:$0xff]
  %v1250 = vld [vmem:[%s2 + $0x88] sm:$0xff]
  %v1251 = vld [vmem:[%s2 + $0x90] sm:$0xff]
  %v1252 = vld [vmem:[%s2 + $0x98] sm:$0xff]
  %v1253 = vld [vmem:[%s2 + $0xa0] sm:$0xff]
  %v1254 = vld [vmem:[%s2 + $0xa8] sm:$0xff]
  %v1255 = vld [vmem:[%s2 + $0xb0] sm:$0xff]
  %v1256 = vld [vmem:[%s2 + $0xb8] sm:$0xff]
  %v1257 = vld [vmem:[%s2 + $0xc0] sm:$0xff]
  %v1258 = vld [vmem:[%s2 + $0xc8] sm:$0xff]
  %v1259 = vld [vmem:[%s2 + $0xd0] sm:$0xff]
  %v1260 = vld [vmem:[%s2 + $0xd8] sm:$0xff]
  %v1261 = vld [vmem:[%s2 + $0xe0] sm:$0xff]
  %v1262 = vld [vmem:[%s2 + $0xe8] sm:$0xff]
  %v1263 = vld [vmem:[%s2 + $0xf0] sm:$0xff]
  %v1264 = vld [vmem:[%s2 + $0xf8] sm:$0xff]
  %v1265 = vlaneseq
  %v1266 = vand.u32 %v1265, 127
  %1267 = vset.pattern.permute.xlu0 0
  %1268 = vperm.xlu0 %1267, %v1233
  %v1269 = vpop.permute.xlu0 %1268
  %1270 = vset.pattern.permute.xlu0 0
  %1271 = vperm.xlu0 %1270, %v1234
  %v1272 = vpop.permute.xlu0 %1271
  %1273 = vset.pattern.permute.xlu0 0
  %1274 = vperm.xlu0 %1273, %v1235
  %v1275 = vpop.permute.xlu0 %1274
  %1276 = vset.pattern.permute.xlu0 0
  %1277 = vperm.xlu0 %1276, %v1236
  %v1278 = vpop.permute.xlu0 %1277
  %1279 = vset.pattern.permute.xlu0 0
  %1280 = vperm.xlu0 %1279, %v1237
  %v1281 = vpop.permute.xlu0 %1280
  %1282 = vset.pattern.permute.xlu0 0
  %1283 = vperm.xlu0 %1282, %v1238
  %v1284 = vpop.permute.xlu0 %1283
  %1285 = vset.pattern.permute.xlu0 0
  %1286 = vperm.xlu0 %1285, %v1239
  %v1287 = vpop.permute.xlu0 %1286
  %1288 = vset.pattern.permute.xlu0 0
  %1289 = vperm.xlu0 %1288, %v1240
  %v1290 = vpop.permute.xlu0 %1289
  %1291 = vset.pattern.permute.xlu0 0
  %1292 = vperm.xlu0 %1291, %v1241
  %v1293 = vpop.permute.xlu0 %1292
  %1294 = vset.pattern.permute.xlu0 0
  %1295 = vperm.xlu0 %1294, %v1242
  %v1296 = vpop.permute.xlu0 %1295
  %1297 = vset.pattern.permute.xlu0 0
  %1298 = vperm.xlu0 %1297, %v1243
  %v1299 = vpop.permute.xlu0 %1298
  %1300 = vset.pattern.permute.xlu0 0
  %1301 = vperm.xlu0 %1300, %v1244
  %v1302 = vpop.permute.xlu0 %1301
  %1303 = vset.pattern.permute.xlu0 0
  %1304 = vperm.xlu0 %1303, %v1245
  %v1305 = vpop.permute.xlu0 %1304
  %1306 = vset.pattern.permute.xlu0 0
  %1307 = vperm.xlu0 %1306, %v1246
  %v1308 = vpop.permute.xlu0 %1307
  %1309 = vset.pattern.permute.xlu0 0
  %1310 = vperm.xlu0 %1309, %v1247
  %v1311 = vpop.permute.xlu0 %1310
  %1312 = vset.pattern.permute.xlu0 0
  %1313 = vperm.xlu0 %1312, %v1248
  %v1314 = vpop.permute.xlu0 %1313
  %1315 = vset.pattern.permute.xlu0 0
  %1316 = vperm.xlu0 %1315, %v1249
  %v1317 = vpop.permute.xlu0 %1316
  %1318 = vset.pattern.permute.xlu0 0
  %1319 = vperm.xlu0 %1318, %v1250
  %v1320 = vpop.permute.xlu0 %1319
  %1321 = vset.pattern.permute.xlu0 0
  %1322 = vperm.xlu0 %1321, %v1251
  %v1323 = vpop.permute.xlu0 %1322
  %1324 = vset.pattern.permute.xlu0 0
  %1325 = vperm.xlu0 %1324, %v1252
  %v1326 = vpop.permute.xlu0 %1325
  %1327 = vset.pattern.permute.xlu0 0
  %1328 = vperm.xlu0 %1327, %v1253
  %v1329 = vpop.permute.xlu0 %1328
  %1330 = vset.pattern.permute.xlu0 0
  %1331 = vperm.xlu0 %1330, %v1254
  %v1332 = vpop.permute.xlu0 %1331
  %1333 = vset.pattern.permute.xlu0 0
  %1334 = vperm.xlu0 %1333, %v1255
  %v1335 = vpop.permute.xlu0 %1334
  %1336 = vset.pattern.permute.xlu0 0
  %1337 = vperm.xlu0 %1336, %v1256
  %v1338 = vpop.permute.xlu0 %1337
  %1339 = vset.pattern.permute.xlu0 0
  %1340 = vperm.xlu0 %1339, %v1257
  %v1341 = vpop.permute.xlu0 %1340
  %1342 = vset.pattern.permute.xlu0 0
  %1343 = vperm.xlu0 %1342, %v1258
  %v1344 = vpop.permute.xlu0 %1343
  %1345 = vset.pattern.permute.xlu0 0
  %1346 = vperm.xlu0 %1345, %v1259
  %v1347 = vpop.permute.xlu0 %1346
  %1348 = vset.pattern.permute.xlu0 0
  %1349 = vperm.xlu0 %1348, %v1260
  %v1350 = vpop.permute.xlu0 %1349
  %1351 = vset.pattern.permute.xlu0 0
  %1352 = vperm.xlu0 %1351, %v1261
  %v1353 = vpop.permute.xlu0 %1352
  %1354 = vset.pattern.permute.xlu0 0
  %1355 = vperm.xlu0 %1354, %v1262
  %v1356 = vpop.permute.xlu0 %1355
  %1357 = vset.pattern.permute.xlu0 0
  %1358 = vperm.xlu0 %1357, %v1263
  %v1359 = vpop.permute.xlu0 %1358
  %1360 = vset.pattern.permute.xlu0 0
  %1361 = vperm.xlu0 %1360, %v1264
  %v1362 = vpop.permute.xlu0 %1361
  %vm1363 = vcmp.eq.s32.totalorder %v1266, %v1269
  %vm1364 = vcmp.eq.s32.totalorder %v1266, %v1272
  %vm1365 = vcmp.eq.s32.totalorder %v1266, %v1275
  %vm1366 = vcmp.eq.s32.totalorder %v1266, %v1278
  %vm1367 = vcmp.eq.s32.totalorder %v1266, %v1281
  %vm1368 = vcmp.eq.s32.totalorder %v1266, %v1284
  %vm1369 = vcmp.eq.s32.totalorder %v1266, %v1287
  %vm1370 = vcmp.eq.s32.totalorder %v1266, %v1290
  %vm1371 = vcmp.eq.s32.totalorder %v1266, %v1293
  %vm1372 = vcmp.eq.s32.totalorder %v1266, %v1296
  %vm1373 = vcmp.eq.s32.totalorder %v1266, %v1299
  %vm1374 = vcmp.eq.s32.totalorder %v1266, %v1302
  %vm1375 = vcmp.eq.s32.totalorder %v1266, %v1305
  %vm1376 = vcmp.eq.s32.totalorder %v1266, %v1308
  %vm1377 = vcmp.eq.s32.totalorder %v1266, %v1311
  %vm1378 = vcmp.eq.s32.totalorder %v1266, %v1314
  %vm1379 = vcmp.eq.s32.totalorder %v1266, %v1317
  %vm1380 = vcmp.eq.s32.totalorder %v1266, %v1320
  %vm1381 = vcmp.eq.s32.totalorder %v1266, %v1323
  %vm1382 = vcmp.eq.s32.totalorder %v1266, %v1326
  %vm1383 = vcmp.eq.s32.totalorder %v1266, %v1329
  %vm1384 = vcmp.eq.s32.totalorder %v1266, %v1332
  %vm1385 = vcmp.eq.s32.totalorder %v1266, %v1335
  %vm1386 = vcmp.eq.s32.totalorder %v1266, %v1338
  %vm1387 = vcmp.eq.s32.totalorder %v1266, %v1341
  %vm1388 = vcmp.eq.s32.totalorder %v1266, %v1344
  %vm1389 = vcmp.eq.s32.totalorder %v1266, %v1347
  %vm1390 = vcmp.eq.s32.totalorder %v1266, %v1350
  %vm1391 = vcmp.eq.s32.totalorder %v1266, %v1353
  %vm1392 = vcmp.eq.s32.totalorder %v1266, %v1356
  %vm1393 = vcmp.eq.s32.totalorder %v1266, %v1359
  %vm1394 = vcmp.eq.s32.totalorder %v1266, %v1362
  %v1395 = vsel %vm1363, 1, 0
  %v1396 = vsel %vm1364, 1, 0
  %v1397 = vsel %vm1365, 1, 0
  %v1398 = vsel %vm1366, 1, 0
  %v1399 = vsel %vm1367, 1, 0
  %v1400 = vsel %vm1368, 1, 0
  %v1401 = vsel %vm1369, 1, 0
  %v1402 = vsel %vm1370, 1, 0
  %v1403 = vsel %vm1371, 1, 0
  %v1404 = vsel %vm1372, 1, 0
  %v1405 = vsel %vm1373, 1, 0
  %v1406 = vsel %vm1374, 1, 0
  %v1407 = vsel %vm1375, 1, 0
  %v1408 = vsel %vm1376, 1, 0
  %v1409 = vsel %vm1377, 1, 0
  %v1410 = vsel %vm1378, 1, 0
  %v1411 = vsel %vm1379, 1, 0
  %v1412 = vsel %vm1380, 1, 0
  %v1413 = vsel %vm1381, 1, 0
  %v1414 = vsel %vm1382, 1, 0
  %v1415 = vsel %vm1383, 1, 0
  %v1416 = vsel %vm1384, 1, 0
  %v1417 = vsel %vm1385, 1, 0
  %v1418 = vsel %vm1386, 1, 0
  %v1419 = vsel %vm1387, 1, 0
  %v1420 = vsel %vm1388, 1, 0
  %v1421 = vsel %vm1389, 1, 0
  %v1422 = vsel %vm1390, 1, 0
  %v1423 = vsel %vm1391, 1, 0
  %v1424 = vsel %vm1392, 1, 0
  %v1425 = vsel %vm1393, 1, 0
  %v1426 = vsel %vm1394, 1, 0
  %v1427 = vcvt.s32.f32 %v1395
  %v1428 = vcvt.s32.f32 %v1396
  %v1429 = vcvt.s32.f32 %v1397
  %v1430 = vcvt.s32.f32 %v1398
  %v1431 = vcvt.s32.f32 %v1399
  %v1432 = vcvt.s32.f32 %v1400
  %v1433 = vcvt.s32.f32 %v1401
  %v1434 = vcvt.s32.f32 %v1402
  %v1435 = vcvt.s32.f32 %v1403
  %v1436 = vcvt.s32.f32 %v1404
  %v1437 = vcvt.s32.f32 %v1405
  %v1438 = vcvt.s32.f32 %v1406
  %v1439 = vcvt.s32.f32 %v1407
  %v1440 = vcvt.s32.f32 %v1408
  %v1441 = vcvt.s32.f32 %v1409
  %v1442 = vcvt.s32.f32 %v1410
  %v1443 = vcvt.s32.f32 %v1411
  %v1444 = vcvt.s32.f32 %v1412
  %v1445 = vcvt.s32.f32 %v1413
  %v1446 = vcvt.s32.f32 %v1414
  %v1447 = vcvt.s32.f32 %v1415
  %v1448 = vcvt.s32.f32 %v1416
  %v1449 = vcvt.s32.f32 %v1417
  %v1450 = vcvt.s32.f32 %v1418
  %v1451 = vcvt.s32.f32 %v1419
  %v1452 = vcvt.s32.f32 %v1420
  %v1453 = vcvt.s32.f32 %v1421
  %v1454 = vcvt.s32.f32 %v1422
  %v1455 = vcvt.s32.f32 %v1423
  %v1456 = vcvt.s32.f32 %v1424
  %v1457 = vcvt.s32.f32 %v1425
  %v1458 = vcvt.s32.f32 %v1426
  %v1459 = vpack.c.bf16 %v1428, %v1427
  %v1460 = vpack.c.bf16 %v1430, %v1429
  %v1461 = vpack.c.bf16 %v1432, %v1431
  %v1462 = vpack.c.bf16 %v1434, %v1433
  %v1463 = vpack.c.bf16 %v1436, %v1435
  %v1464 = vpack.c.bf16 %v1438, %v1437
  %v1465 = vpack.c.bf16 %v1440, %v1439
  %v1466 = vpack.c.bf16 %v1442, %v1441
  %v1467 = vpack.c.bf16 %v1444, %v1443
  %v1468 = vpack.c.bf16 %v1446, %v1445
  %v1469 = vpack.c.bf16 %v1448, %v1447
  %v1470 = vpack.c.bf16 %v1450, %v1449
  %v1471 = vpack.c.bf16 %v1452, %v1451
  %v1472 = vpack.c.bf16 %v1454, %v1453
  %v1473 = vpack.c.bf16 %v1456, %v1455
  %v1474 = vpack.c.bf16 %v1458, %v1457
  %v1475 = vld [vmem:[%s3] sm:$0xf]
  %v1476 = vld [vmem:[%s3 + $0x4] sm:$0xf]
  %v1477 = vld [vmem:[%s3 + $0x8] sm:$0xf]
  %v1478 = vld [vmem:[%s3 + $0xc] sm:$0xf]
  %v1479 = vld [vmem:[%s3 + $0x10] sm:$0xf]
  %v1480 = vld [vmem:[%s3 + $0x14] sm:$0xf]
  %v1481 = vld [vmem:[%s3 + $0x18] sm:$0xf]
  %v1482 = vld [vmem:[%s3 + $0x1c] sm:$0xf]
  %v1491 = vunpack.c.l.b16 %v1475
  %v1492 = vunpack.c.l.b16 %v1476
  %v1493 = vunpack.c.l.b16 %v1477
  %v1494 = vunpack.c.l.b16 %v1478
  %v1495 = vunpack.c.l.b16 %v1479
  %v1496 = vunpack.c.l.b16 %v1480
  %v1497 = vunpack.c.l.b16 %v1481
  %v1498 = vunpack.c.l.b16 %v1482
  %v1499 = vpack.c.b16 %v1492, %v1491
  %v1500 = vpack.c.b16 %v1494, %v1493
  %v1501 = vpack.c.b16 %v1496, %v1495
  %v1502 = vpack.c.b16 %v1498, %v1497
  %v1508 = vsel %vm687, %v1459, 0
  %v1511 = vsel %vm687, %v1460, 0
  %v1514 = vsel %vm687, %v1461, 0
  %v1517 = vsel %vm687, %v1462, 0
  %v1520 = vsel %vm687, %v1463, 0
  %v1523 = vsel %vm687, %v1464, 0
  %v1526 = vsel %vm687, %v1465, 0
  %v1529 = vsel %vm687, %v1466, 0
  %v1532 = vsel %vm687, %v1467, 0
  %v1535 = vsel %vm687, %v1468, 0
  %v1538 = vsel %vm687, %v1469, 0
  %v1541 = vsel %vm687, %v1470, 0
  %v1544 = vsel %vm687, %v1471, 0
  %v1547 = vsel %vm687, %v1472, 0
  %v1550 = vsel %vm687, %v1473, 0
  %v1553 = vsel %vm687, %v1474, 0
  %1555 = vmatprep.subr.bf16.mxu0 0
  %1556 = vmatpush1.bf16.msra.mxu0 %v1499
  %1557 = vmatprep.subr.bf16.mxu0 0
  %1558 = vmatpush1.bf16.msra.mxu0 %v1500
  %1559 = vmatprep.subr.bf16.mxu0 0
  %1560 = vmatpush1.bf16.msra.mxu0 %v1501
  %1561 = vmatprep.subr.bf16.mxu0 0
  %1562 = vmatpush1.bf16.msra.mxu0 %v1502
  %1563 = vmatprep.subr.bf16.mxu0 0
  %1564 = vmatpush1.bf16.msra.mxu0 0
  %1565 = vmatprep.subr.bf16.mxu0 0
  %1566 = vmatpush1.bf16.msra.mxu0 0
  %1567 = vmatprep.subr.bf16.mxu0 0
  %1568 = vmatpush1.bf16.msra.mxu0 0
  %1569 = vmatprep.subr.bf16.mxu0 0
  %1570 = vmatpush1.bf16.msra.mxu0 0
  %1571 = vmatprep.subr.bf16.mxu0 0
  %1572 = vmatpush1.bf16.msra.mxu0 0
  %1573 = vmatprep.subr.bf16.mxu0 0
  %1574 = vmatpush1.bf16.msra.mxu0 0
  %1575 = vmatprep.subr.bf16.mxu0 0
  %1576 = vmatpush1.bf16.msra.mxu0 0
  %1577 = vmatprep.subr.bf16.mxu0 0
  %1578 = vmatpush1.bf16.msra.mxu0 0
  %1579 = vmatprep.subr.bf16.mxu0 0
  %1580 = vmatpush1.bf16.msra.mxu0 0
  %1581 = vmatprep.subr.bf16.mxu0 0
  %1582 = vmatpush1.bf16.msra.mxu0 0
  %1583 = vmatprep.subr.bf16.mxu0 0
  %1584 = vmatpush1.bf16.msra.mxu0 0
  %1585 = vmatprep.subr.bf16.mxu0 0
  %1586 = vmatpush1.bf16.msra.mxu0 0
  %1587 = vmatprep.mubr.bf16.mxu0 0
  %1588 = vmatmul.mubr.bf16.gmra.mrb[0].mxu0 %v1508
  %v1589 = vpop.f32.mrb[0].mxu0
  %v1590 = vadd.f32 0.0, %v1589
  %v1591 = vpop.f32.mrb[0].mxu0
  %v1592 = vpop.f32.mrb[0].mxu0
  %v1593 = vadd.f32 0.0, %v1592
  %v1594 = vpop.f32.mrb[0].mxu0
  %1595 = vmatprep.mubr.bf16.mxu0 0
  %1596 = vmatmul.mubr.bf16.gmra.mrb[0].mxu0 %v1511
  %v1597 = vpop.f32.mrb[0].mxu0
  %v1598 = vadd.f32 0.0, %v1597
  %v1599 = vpop.f32.mrb[0].mxu0
  %v1600 = vpop.f32.mrb[0].mxu0
  %v1601 = vadd.f32 0.0, %v1600
  %v1602 = vpop.f32.mrb[0].mxu0
  %1603 = vmatprep.mubr.bf16.mxu0 0
  %1604 = vmatmul.mubr.bf16.gmra.mrb[0].mxu0 %v1514
  %v1605 = vpop.f32.mrb[0].mxu0
  %v1606 = vadd.f32 0.0, %v1605
  %v1607 = vpop.f32.mrb[0].mxu0
  %v1608 = vpop.f32.mrb[0].mxu0
  %v1609 = vadd.f32 0.0, %v1608
  %v1610 = vpop.f32.mrb[0].mxu0
  %1611 = vmatprep.mubr.bf16.mxu0 0
  %1612 = vmatmul.mubr.bf16.gmra.mrb[0].mxu0 %v1517
  %v1613 = vpop.f32.mrb[0].mxu0
  %v1614 = vadd.f32 0.0, %v1613
  %v1615 = vpop.f32.mrb[0].mxu0
  %v1616 = vpop.f32.mrb[0].mxu0
  %v1617 = vadd.f32 0.0, %v1616
  %v1618 = vpop.f32.mrb[0].mxu0
  %1619 = vmatprep.mubr.bf16.mxu0 0
  %1620 = vmatmul.mubr.bf16.gmra.mrb[0].mxu0 %v1520
  %v1621 = vpop.f32.mrb[0].mxu0
  %v1622 = vadd.f32 0.0, %v1621
  %v1623 = vpop.f32.mrb[0].mxu0
  %v1624 = vpop.f32.mrb[0].mxu0
  %v1625 = vadd.f32 0.0, %v1624
  %v1626 = vpop.f32.mrb[0].mxu0
  %1627 = vmatprep.mubr.bf16.mxu0 0
  %1628 = vmatmul.mubr.bf16.gmra.mrb[0].mxu0 %v1523
  %v1629 = vpop.f32.mrb[0].mxu0
  %v1630 = vadd.f32 0.0, %v1629
  %v1631 = vpop.f32.mrb[0].mxu0
  %v1632 = vpop.f32.mrb[0].mxu0
  %v1633 = vadd.f32 0.0, %v1632
  %v1634 = vpop.f32.mrb[0].mxu0
  %1635 = vmatprep.mubr.bf16.mxu0 0
  %1636 = vmatmul.mubr.bf16.gmra.mrb[0].mxu0 %v1526
  %v1637 = vpop.f32.mrb[0].mxu0
  %v1638 = vadd.f32 0.0, %v1637
  %v1639 = vpop.f32.mrb[0].mxu0
  %v1640 = vpop.f32.mrb[0].mxu0
  %v1641 = vadd.f32 0.0, %v1640
  %v1642 = vpop.f32.mrb[0].mxu0
  %1643 = vmatprep.mubr.bf16.mxu0 0
  %1644 = vmatmul.mubr.bf16.gmra.mrb[0].mxu0 %v1529
  %v1645 = vpop.f32.mrb[0].mxu0
  %v1646 = vadd.f32 0.0, %v1645
  %v1647 = vpop.f32.mrb[0].mxu0
  %v1648 = vpop.f32.mrb[0].mxu0
  %v1649 = vadd.f32 0.0, %v1648
  %v1650 = vpop.f32.mrb[0].mxu0
  %1651 = vmatprep.mubr.bf16.mxu0 0
  %1652 = vmatmul.mubr.bf16.gmra.mrb[0].mxu0 %v1532
  %v1653 = vpop.f32.mrb[0].mxu0
  %v1654 = vadd.f32 0.0, %v1653
  %v1655 = vpop.f32.mrb[0].mxu0
  %v1656 = vpop.f32.mrb[0].mxu0
  %v1657 = vadd.f32 0.0, %v1656
  %v1658 = vpop.f32.mrb[0].mxu0
  %1659 = vmatprep.mubr.bf16.mxu0 0
  %1660 = vmatmul.mubr.bf16.gmra.mrb[0].mxu0 %v1535
  %v1661 = vpop.f32.mrb[0].mxu0
  %v1662 = vadd.f32 0.0, %v1661
  %v1663 = vpop.f32.mrb[0].mxu0
  %v1664 = vpop.f32.mrb[0].mxu0
  %v1665 = vadd.f32 0.0, %v1664
  %v1666 = vpop.f32.mrb[0].mxu0
  %1667 = vmatprep.mubr.bf16.mxu0 0
  %1668 = vmatmul.mubr.bf16.gmra.mrb[0].mxu0 %v1538
  %v1669 = vpop.f32.mrb[0].mxu0
  %v1670 = vadd.f32 0.0, %v1669
  %v1671 = vpop.f32.mrb[0].mxu0
  %v1672 = vpop.f32.mrb[0].mxu0
  %v1673 = vadd.f32 0.0, %v1672
  %v1674 = vpop.f32.mrb[0].mxu0
  %1675 = vmatprep.mubr.bf16.mxu0 0
  %1676 = vmatmul.mubr.bf16.gmra.mrb[0].mxu0 %v1541
  %v1677 = vpop.f32.mrb[0].mxu0
  %v1678 = vadd.f32 0.0, %v1677
  %v1679 = vpop.f32.mrb[0].mxu0
  %v1680 = vpop.f32.mrb[0].mxu0
  %v1681 = vadd.f32 0.0, %v1680
  %v1682 = vpop.f32.mrb[0].mxu0
  %1683 = vmatprep.mubr.bf16.mxu0 0
  %1684 = vmatmul.mubr.bf16.gmra.mrb[0].mxu0 %v1544
  %v1685 = vpop.f32.mrb[0].mxu0
  %v1686 = vadd.f32 0.0, %v1685
  %v1687 = vpop.f32.mrb[0].mxu0
  %v1688 = vpop.f32.mrb[0].mxu0
  %v1689 = vadd.f32 0.0, %v1688
  %v1690 = vpop.f32.mrb[0].mxu0
  %1691 = vmatprep.mubr.bf16.mxu0 0
  %1692 = vmatmul.mubr.bf16.gmra.mrb[0].mxu0 %v1547
  %v1693 = vpop.f32.mrb[0].mxu0
  %v1694 = vadd.f32 0.0, %v1693
  %v1695 = vpop.f32.mrb[0].mxu0
  %v1696 = vpop.f32.mrb[0].mxu0
  %v1697 = vadd.f32 0.0, %v1696
  %v1698 = vpop.f32.mrb[0].mxu0
  %1699 = vmatprep.mubr.bf16.mxu0 0
  %1700 = vmatmul.mubr.bf16.gmra.mrb[0].mxu0 %v1550
  %v1701 = vpop.f32.mrb[0].mxu0
  %v1702 = vadd.f32 0.0, %v1701
  %v1703 = vpop.f32.mrb[0].mxu0
  %v1704 = vpop.f32.mrb[0].mxu0
  %v1705 = vadd.f32 0.0, %v1704
  %v1706 = vpop.f32.mrb[0].mxu0
  %1707 = vmatprep.mubr.bf16.mxu0 0
  %1708 = vmatmul.mubr.bf16.gmra.mrb[0].mxu0 %v1553
  %v1709 = vpop.f32.mrb[0].mxu0
  %v1710 = vadd.f32 0.0, %v1709
  %v1711 = vpop.f32.mrb[0].mxu0
  %v1712 = vpop.f32.mrb[0].mxu0
  %v1713 = vadd.f32 0.0, %v1712
  %v1714 = vpop.f32.mrb[0].mxu0
  %1715 = vdwg.mxu0
  %v1716 = vmul.f32 %v1590, %v1201
  %v1717 = vmul.f32 %v1593, %v1202
  %v1718 = vmul.f32 %v1598, %v1203
  %v1719 = vmul.f32 %v1601, %v1204
  %v1720 = vmul.f32 %v1606, %v1205
  %v1721 = vmul.f32 %v1609, %v1206
  %v1722 = vmul.f32 %v1614, %v1207
  %v1723 = vmul.f32 %v1617, %v1208
  %v1724 = vmul.f32 %v1622, %v1209
  %v1725 = vmul.f32 %v1625, %v1210
  %v1726 = vmul.f32 %v1630, %v1211
  %v1727 = vmul.f32 %v1633, %v1212
  %v1728 = vmul.f32 %v1638, %v1213
  %v1729 = vmul.f32 %v1641, %v1214
  %v1730 = vmul.f32 %v1646, %v1215
  %v1731 = vmul.f32 %v1649, %v1216
  %v1732 = vmul.f32 %v1654, %v1217
  %v1733 = vmul.f32 %v1657, %v1218
  %v1734 = vmul.f32 %v1662, %v1219
  %v1735 = vmul.f32 %v1665, %v1220
  %v1736 = vmul.f32 %v1670, %v1221
  %v1737 = vmul.f32 %v1673, %v1222
  %v1738 = vmul.f32 %v1678, %v1223
  %v1739 = vmul.f32 %v1681, %v1224
  %v1740 = vmul.f32 %v1686, %v1225
  %v1741 = vmul.f32 %v1689, %v1226
  %v1742 = vmul.f32 %v1694, %v1227
  %v1743 = vmul.f32 %v1697, %v1228
  %v1744 = vmul.f32 %v1702, %v1229
  %v1745 = vmul.f32 %v1705, %v1230
  %v1746 = vmul.f32 %v1710, %v1231
  %v1747 = vmul.f32 %v1713, %v1232
  %v1748 = vpack.c.bf16 %v1717, %v1716
  %v1749 = vpack.c.bf16 %v1719, %v1718
  %v1750 = vpack.c.bf16 %v1721, %v1720
  %v1751 = vpack.c.bf16 %v1723, %v1722
  %v1752 = vpack.c.bf16 %v1725, %v1724
  %v1753 = vpack.c.bf16 %v1727, %v1726
  %v1754 = vpack.c.bf16 %v1729, %v1728
  %v1755 = vpack.c.bf16 %v1731, %v1730
  %v1756 = vpack.c.bf16 %v1733, %v1732
  %v1757 = vpack.c.bf16 %v1735, %v1734
  %v1758 = vpack.c.bf16 %v1737, %v1736
  %v1759 = vpack.c.bf16 %v1739, %v1738
  %v1760 = vpack.c.bf16 %v1741, %v1740
  %v1761 = vpack.c.bf16 %v1743, %v1742
  %v1762 = vpack.c.bf16 %v1745, %v1744
  %v1763 = vpack.c.bf16 %v1747, %v1746
  %v1780 = vunpack.c.l.b16 %v1748
  %v1781 = vunpack.c.h.b16 %v1748
  %v1782 = vunpack.c.l.b16 %v1749
  %v1783 = vunpack.c.h.b16 %v1749
  %v1784 = vunpack.c.l.b16 %v1750
  %v1785 = vunpack.c.h.b16 %v1750
  %v1786 = vunpack.c.l.b16 %v1751
  %v1787 = vunpack.c.h.b16 %v1751
  %v1788 = vunpack.c.l.b16 %v1752
  %v1789 = vunpack.c.h.b16 %v1752
  %v1790 = vunpack.c.l.b16 %v1753
  %v1791 = vunpack.c.h.b16 %v1753
  %v1792 = vunpack.c.l.b16 %v1754
  %v1793 = vunpack.c.h.b16 %v1754
  %v1794 = vunpack.c.l.b16 %v1755
  %v1795 = vunpack.c.h.b16 %v1755
  %v1796 = vunpack.c.l.b16 %v1756
  %v1797 = vunpack.c.h.b16 %v1756
  %v1798 = vunpack.c.l.b16 %v1757
  %v1799 = vunpack.c.h.b16 %v1757
  %v1800 = vunpack.c.l.b16 %v1758
  %v1801 = vunpack.c.h.b16 %v1758
  %v1802 = vunpack.c.l.b16 %v1759
  %v1803 = vunpack.c.h.b16 %v1759
  %v1804 = vunpack.c.l.b16 %v1760
  %v1805 = vunpack.c.h.b16 %v1760
  %v1806 = vunpack.c.l.b16 %v1761
  %v1807 = vunpack.c.h.b16 %v1761
  %v1808 = vunpack.c.l.b16 %v1762
  %v1809 = vunpack.c.h.b16 %v1762
  %v1810 = vunpack.c.l.b16 %v1763
  %v1811 = vunpack.c.h.b16 %v1763
  %v1812 = vpack.c.b16 %v1780, %v1780
  %v1813 = vpack.c.b16 %v1781, %v1781
  %v1814 = vpack.c.b16 %v1782, %v1782
  %v1815 = vpack.c.b16 %v1783, %v1783
  %v1816 = vpack.c.b16 %v1784, %v1784
  %v1817 = vpack.c.b16 %v1785, %v1785
  %v1818 = vpack.c.b16 %v1786, %v1786
  %v1819 = vpack.c.b16 %v1787, %v1787
  %v1820 = vpack.c.b16 %v1788, %v1788
  %v1821 = vpack.c.b16 %v1789, %v1789
  %v1822 = vpack.c.b16 %v1790, %v1790
  %v1823 = vpack.c.b16 %v1791, %v1791
  %v1824 = vpack.c.b16 %v1792, %v1792
  %v1825 = vpack.c.b16 %v1793, %v1793
  %v1826 = vpack.c.b16 %v1794, %v1794
  %v1827 = vpack.c.b16 %v1795, %v1795
  %v1828 = vpack.c.b16 %v1796, %v1796
  %v1829 = vpack.c.b16 %v1797, %v1797
  %v1830 = vpack.c.b16 %v1798, %v1798
  %v1831 = vpack.c.b16 %v1799, %v1799
  %v1832 = vpack.c.b16 %v1800, %v1800
  %v1833 = vpack.c.b16 %v1801, %v1801
  %v1834 = vpack.c.b16 %v1802, %v1802
  %v1835 = vpack.c.b16 %v1803, %v1803
  %v1836 = vpack.c.b16 %v1804, %v1804
  %v1837 = vpack.c.b16 %v1805, %v1805
  %v1838 = vpack.c.b16 %v1806, %v1806
  %v1839 = vpack.c.b16 %v1807, %v1807
  %v1840 = vpack.c.b16 %v1808, %v1808
  %v1841 = vpack.c.b16 %v1809, %v1809
  %v1842 = vpack.c.b16 %v1810, %v1810
  %v1843 = vpack.c.b16 %v1811, %v1811
  %vm1876 = vcmask 519168
  %1877 = vst.msk [vmem:[%s9] sm:$0xf] %vm1876, %v1812
  %1878 = vst.msk [vmem:[%s9 + $0x4] sm:$0xf] %vm1876, %v1813
  %1879 = vst.msk [vmem:[%s9 + $0x8] sm:$0xf] %vm1876, %v1814
  %1880 = vst.msk [vmem:[%s9 + $0xc] sm:$0xf] %vm1876, %v1815
  %1881 = vst.msk [vmem:[%s9 + $0x10] sm:$0xf] %vm1876, %v1816
  %1882 = vst.msk [vmem:[%s9 + $0x14] sm:$0xf] %vm1876, %v1817
  %1883 = vst.msk [vmem:[%s9 + $0x18] sm:$0xf] %vm1876, %v1818
  %1884 = vst.msk [vmem:[%s9 + $0x1c] sm:$0xf] %vm1876, %v1819
  %1885 = vst.msk [vmem:[%s9 + $0x20] sm:$0xf] %vm1876, %v1820
  %1886 = vst.msk [vmem:[%s9 + $0x24] sm:$0xf] %vm1876, %v1821
  %1887 = vst.msk [vmem:[%s9 + $0x28] sm:$0xf] %vm1876, %v1822
  %1888 = vst.msk [vmem:[%s9 + $0x2c] sm:$0xf] %vm1876, %v1823
  %1889 = vst.msk [vmem:[%s9 + $0x30] sm:$0xf] %vm1876, %v1824
  %1890 = vst.msk [vmem:[%s9 + $0x34] sm:$0xf] %vm1876, %v1825
  %1891 = vst.msk [vmem:[%s9 + $0x38] sm:$0xf] %vm1876, %v1826
  %1892 = vst.msk [vmem:[%s9 + $0x3c] sm:$0xf] %vm1876, %v1827
  %1893 = vst.msk [vmem:[%s9 + $0x40] sm:$0xf] %vm1876, %v1828
  %1894 = vst.msk [vmem:[%s9 + $0x44] sm:$0xf] %vm1876, %v1829
  %1895 = vst.msk [vmem:[%s9 + $0x48] sm:$0xf] %vm1876, %v1830
  %1896 = vst.msk [vmem:[%s9 + $0x4c] sm:$0xf] %vm1876, %v1831
  %1897 = vst.msk [vmem:[%s9 + $0x50] sm:$0xf] %vm1876, %v1832
  %1898 = vst.msk [vmem:[%s9 + $0x54] sm:$0xf] %vm1876, %v1833
  %1899 = vst.msk [vmem:[%s9 + $0x58] sm:$0xf] %vm1876, %v1834
  %1900 = vst.msk [vmem:[%s9 + $0x5c] sm:$0xf] %vm1876, %v1835
  %1901 = vst.msk [vmem:[%s9 + $0x60] sm:$0xf] %vm1876, %v1836
  %1902 = vst.msk [vmem:[%s9 + $0x64] sm:$0xf] %vm1876, %v1837
  %1903 = vst.msk [vmem:[%s9 + $0x68] sm:$0xf] %vm1876, %v1838
  %1904 = vst.msk [vmem:[%s9 + $0x6c] sm:$0xf] %vm1876, %v1839
  %1905 = vst.msk [vmem:[%s9 + $0x70] sm:$0xf] %vm1876, %v1840
  %1906 = vst.msk [vmem:[%s9 + $0x74] sm:$0xf] %vm1876, %v1841
  %1907 = vst.msk [vmem:[%s9 + $0x78] sm:$0xf] %vm1876, %v1842
  %1908 = vst.msk [vmem:[%s9 + $0x7c] sm:$0xf] %vm1876, %v1843
  // Predicated region
  $region38: #{tpu_custom_call.1} parent=0 // pred_check
    _
  $region39: #{tpu_custom_call.1} parent=0 // pred_check_branch
    %1910 = sbr.rel (0) target = $region41
  $region40: #{tpu_custom_call.1} parent=0 // pred_region
    _
  $region41: #{tpu_custom_call.1} parent=0 // pred_fallthru
    _
  // Predicated region
  $region42: #{tpu_custom_call.1} parent=0 // pred_check
    _
  $region43: #{tpu_custom_call.1} parent=0 // pred_check_branch
    %1912 = sbr.rel (0) target = $region45
  $region44: #{tpu_custom_call.1} parent=0 // pred_region
    _
  $region45: #{tpu_custom_call.1} parent=0 // pred_fallthru
    _

</llo_original>
